<compile_context>
chip_gen: v7x
topology: tpu7x:2x2x1
jax: 0.10.0
libtpu: 0.0.40
codegen_flags: <defaults>
</compile_context>

<pallas_src>
import functools
from typing import List

import jax
import jax.numpy as jnp
from jax import lax
from jax.experimental import pallas as pl
from jax.experimental.pallas import tpu as pltpu


def _round_up(x: int, m: int) -> int:
    return ((x + m - 1) // m) * m


# ---------------------------------------------------------------------------
# Pallas kernel: fused 3x3 conv (+ folded BN bias) + ReLU for one image and
# one Cout tile.  The 9 taps are accumulated as 9 (M, Cin) @ (Cin, tn) MXU
# matmuls into an f32 accumulator, entirely from VMEM-resident tiles.
# ---------------------------------------------------------------------------
def _conv3x3_bn_relu_kernel(Ho, Wo, Cin, stride, x_ref, w_ref, b_ref, o_ref):
    # x_ref : (s*s, Hs, Ws, Cin)  bf16  -- stride-phase planes of padded image
    # w_ref : (9, Cin, tn)        bf16  -- folded conv weights, tap-major
    # b_ref : (1, tn)             f32   -- folded BN bias
    # o_ref : (1, Ho*Wo, tn)      bf16
    s = stride
    M = Ho * Wo
    tn = o_ref.shape[-1]

    # Load each phase plane once; every tap is a static unit-stride window.
    planes = [x_ref[i] for i in range(s * s)]          # each (Hs, Ws, Cin)

    acc = jnp.zeros((M, tn), jnp.float32)
    for kh in range(3):
        for kw in range(3):
            p, oh = kh % s, kh // s
            q, ow = kw % s, kw // s
            xt = planes[p * s + q][oh:oh + Ho, ow:ow + Wo, :]   # (Ho, Wo, Cin)
            xt = xt.reshape(M, Cin)
            acc = acc + jnp.dot(xt, w_ref[kh * 3 + kw],
                                preferred_element_type=jnp.float32)

    y = jnp.maximum(acc + b_ref[...], 0.0)             # bias + ReLU in f32
    o_ref[0] = y.astype(o_ref.dtype)


def conv3x3_bn_relu(x_nhwc: jnp.ndarray, w_taps: jnp.ndarray, bias: jnp.ndarray,
                    stride: int) -> jnp.ndarray:
    """3x3 conv (pad=1, given stride) + folded-BN bias + ReLU.

    x_nhwc : (N, H, W, Cin) float (cast to bf16 for the MXU)
    w_taps : (9, Cin, Cp) bf16, Cp = Cout rounded up to a multiple of 128
    bias   : (1, Cp) f32
    returns: (N, Ho, Wo, Cp) bf16 (padded output lanes are zero)
    """
    N, H, W, Cin = x_nhwc.shape
    Cp = w_taps.shape[-1]
    s = int(stride)
    Ho = (H + 2 - 3) // s + 1
    Wo = (W + 2 - 3) // s + 1
    max_off = 2 // s                    # largest per-phase tap offset (3x3 kernel)
    Hs, Ws = Ho + max_off, Wo + max_off

    # --- wrapper glue: pad + stride-phase repartition (no data inflation) ---
    x = x_nhwc.astype(jnp.bfloat16)
    xp = jnp.pad(x, ((0, 0),
                     (1, 1 + s * Hs - (H + 2)),
                     (1, 1 + s * Ws - (W + 2)),
                     (0, 0)))
    phases = [xp[:, p::s, q::s, :] for p in range(s) for q in range(s)]
    xph = jnp.stack(phases, axis=1).reshape(N * s * s, Hs, Ws, Cin)

    M = Ho * Wo
    tn = 256 if Cp % 256 == 0 else 128      # 256-wide tiles for v6e/v7x MXU
    grid = (N, Cp // tn)

    kernel = functools.partial(_conv3x3_bn_relu_kernel, Ho, Wo, Cin, s)
    cost = pl.CostEstimate(
        flops=2 * N * M * 9 * Cin * Cp,
        transcendentals=0,
        bytes_accessed=(xph.size * 2 * (Cp // tn) + w_taps.size * 2
                        + bias.size * 4 + N * M * Cp * 2),
    )

    out = pl.pallas_call(
        kernel,
        out_shape=jax.ShapeDtypeStruct((N, M, Cp), jnp.bfloat16),
        grid_spec=pltpu.PrefetchScalarGridSpec(
            num_scalar_prefetch=0,
            grid=grid,
            in_specs=[
                pl.BlockSpec((s * s, Hs, Ws, Cin), lambda n, j: (n, 0, 0, 0)),
                pl.BlockSpec((9, Cin, tn), lambda n, j: (0, 0, j)),
                pl.BlockSpec((1, tn), lambda n, j: (0, j)),
            ],
            out_specs=pl.BlockSpec((1, M, tn), lambda n, j: (n, 0, j)),
        ),
        compiler_params=pltpu.CompilerParams(
            dimension_semantics=("parallel", "parallel")),
        cost_estimate=cost,
    )(xph, w_taps, bias)

    # TODO(synk): for large spatial resolutions, add an H-tile grid axis with a
    # manually DMA'd 1-pixel halo (memory_space=pl.ANY) and a K-reduction grid
    # axis for very wide channels; whole-image VMEM tiles are fine at these sizes.
    return out.reshape(N, Ho, Wo, Cp)


# ---------------------------------------------------------------------------
# Parameter construction (deterministic, synthetic) with eval-mode BN folding
# ---------------------------------------------------------------------------
def _fold_bn_to_taps(w, gamma, beta, mean, var, cout_padded, eps=1e-5):
    """Fold eval-mode BN into conv weight (Cout,Cin,3,3); emit tap-major bf16
    weights zero-padded to a lane-dense Cout."""
    cout, cin = w.shape[0], w.shape[1]
    scale = gamma / jnp.sqrt(var + eps)                       # (Cout,)
    w_f = w * scale[:, None, None, None]                      # (Cout,Cin,3,3)
    b = beta - mean * scale                                   # (Cout,)
    w_taps = jnp.transpose(w_f, (2, 3, 1, 0)).reshape(9, cin, cout)   # tap-major
    w_taps = jnp.pad(w_taps, ((0, 0), (0, 0), (0, cout_padded - cout)))
    b = jnp.pad(b, (0, cout_padded - cout)).reshape(1, cout_padded)
    return w_taps.astype(jnp.bfloat16), b.astype(jnp.float32)


def _make_block_params(key, cin, cout):
    """One Conv3x3(bias=False)+BN block, deterministically initialized."""
    kw_, kg, kb = jax.random.split(key, 3)
    fan_in = cin * 9
    w = jax.random.normal(kw_, (cout, cin, 3, 3), jnp.float32) / jnp.sqrt(fan_in)
    gamma = 1.0 + 0.05 * jax.random.normal(kg, (cout,), jnp.float32)
    beta = 0.05 * jax.random.normal(kb, (cout,), jnp.float32)
    mean = jnp.zeros((cout,), jnp.float32)
    var = jnp.ones((cout,), jnp.float32)
    cp = _round_up(cout, 128)
    return _fold_bn_to_taps(w, gamma, beta, mean, var, cp)


class UNetBackbonePallas:
    """Pallas re-implementation of UNetBackboneBase.forward.

    Each stage = `num_blocks` Conv3x3-BN-ReLU blocks; the first block in a
    stage uses `stride`, the rest use stride 1 (BN folded, eval mode).
    """

    def __init__(self, key, strides_list: List[int], width_list: List[int],
                 num_blocks_list: List[int], is_out_feature_list: List[bool],
                 in_channels: int = 3):
        self.strides_list = strides_list
        self.width_list = width_list
        self.num_blocks_list = num_blocks_list
        self.is_out_feature_list = is_out_feature_list
        self.num_stages = len(strides_list)
        assert self.num_stages == len(width_list) == len(num_blocks_list) == \
            len(is_out_feature_list), "Backbone spec args must match num stages"

        self.stages = []  # list of list of (w_taps, bias, stride, cout)
        cin = in_channels
        for i in range(self.num_stages):
            cout = width_list[i]
            blocks = []
            for b in range(num_blocks_list[i]):
                key, sub = jax.random.split(key)
                w_taps, bias = _make_block_params(sub, cin, cout)
                stride = strides_list[i] if b == 0 else 1
                blocks.append((w_taps, bias, stride, cout))
                cin = cout
            self.stages.append(blocks)

    def get_backbone_output_number_of_channels(self) -> List[int]:
        return [c for c, o in zip(self.width_list, self.is_out_feature_list) if o]

    def get_all_number_of_channels(self) -> List[int]:
        return self.width_list

    def forward(self, x_nhwc: jnp.ndarray) -> List[jnp.ndarray]:
        # TODO(synk): fuse consecutive stride-1 blocks of a stage into a single
        # pallas_call keeping the intermediate tile resident in VMEM (halo=1).
        outs = []
        x = x_nhwc
        for blocks, is_out in zip(self.stages, self.is_out_feature_list):
            for (w_taps, bias, stride, cout) in blocks:
                y = conv3x3_bn_relu(x, w_taps, bias, stride)
                x = y[..., :cout]          # strip lane padding
            if is_out:
                outs.append(x)
        return outs


# ---------------------------------------------------------------------------
# Pure-JAX reference (XLA conv, same bf16 operand quantization) for checking
# ---------------------------------------------------------------------------
def _reference_forward(model: UNetBackbonePallas, x_nhwc):
    outs = []
    x = x_nhwc.astype(jnp.bfloat16).astype(jnp.float32)
    for blocks, is_out in zip(model.stages, model.is_out_feature_list):
        for (w_taps, bias, stride, cout) in blocks:
            cin = w_taps.shape[1]
            w_hwio = w_taps[:, :, :cout].astype(jnp.float32).reshape(3, 3, cin, cout)
            y = lax.conv_general_dilated(
                x, w_hwio, window_strides=(stride, stride),
                padding=((1, 1), (1, 1)),
                dimension_numbers=("NHWC", "HWIO", "NHWC"),
                precision=lax.Precision.HIGHEST)
            y = jnp.maximum(y + bias[0, :cout], 0.0)
            x = y.astype(jnp.bfloat16).astype(jnp.float32)   # match kernel bf16 acts
        if is_out:
            outs.append(x)
    return outs


# ---------------------------------------------------------------------------
if __name__ == "__main__":
    key = jax.random.PRNGKey(0)
    k_x, k_p = jax.random.split(key)

    # PyTorch-style NCHW input, small shapes.
    x_nchw = jax.random.normal(k_x, (2, 4, 16, 16), jnp.float32)
    x_nhwc = jnp.transpose(x_nchw, (0, 2, 3, 1))  # layout: NCHW -> NHWC

    model = UNetBackbonePallas(
        k_p,
        strides_list=[1, 2, 2],
        width_list=[8, 16, 32],
        num_blocks_list=[1, 2, 2],
        is_out_feature_list=[True, True, True],
        in_channels=4,
    )

    outs = model.forward(x_nhwc)
    outs = [jax.block_until_ready(o) for o in outs]

    # Sanity-check against the XLA reference conv (same bf16 quantization).
    refs = _reference_forward(model, x_nhwc)
    for o, r in zip(outs, refs):
        assert o.shape == r.shape, (o.shape, r.shape)
        assert jnp.allclose(o.astype(jnp.float32), r, rtol=2e-2, atol=1e-2), \
            "mismatch vs reference"

    # Expected output (NHWC) shapes: (2,16,16,8), (2,8,8,16), (2,4,4,32)
    print("KERNEL_OK")
</pallas_src>

<mosaic_0001>
module attributes {stable_mosaic.version = 11 : i64} {
  func.func @_conv3x3_bn_relu_kernel(%arg0: i32, %arg1: i32, %arg2: memref<1x18x18x4xbf16, #tpu.memory_space<vmem>>, %arg3: memref<9x4x128xbf16, #tpu.memory_space<vmem>>, %arg4: memref<1x128xf32, #tpu.memory_space<vmem>>, %arg5: memref<1x256x128xbf16, #tpu.memory_space<vmem>>) attributes {dimension_semantics = [#tpu.dimension_semantics<parallel>, #tpu.dimension_semantics<parallel>], iteration_bounds = array<i64: 2, 1>, scalar_prefetch = 0 : i64, scratch_operands = 0 : i64, tpu.core_type = #tpu.core_type<tc>, window_params = [{transform_indices = @transform_0, window_bounds = array<i64: 1, 18, 18, 4>}, {transform_indices = @transform_1, window_bounds = array<i64: 9, 4, 128>}, {transform_indices = @transform_2, window_bounds = array<i64: 1, 128>}, {transform_indices = @transform_3, window_bounds = array<i64: 1, 256, 128>}]} {
    %c0 = arith.constant 0 : index
    %c0_0 = arith.constant 0 : index
    %c0_1 = arith.constant 0 : index
    %c0_2 = arith.constant 0 : index
    %0 = vector.load %arg2[%c0, %c0_0, %c0_1, %c0_2] : memref<1x18x18x4xbf16, #tpu.memory_space<vmem>>, vector<1x18x18x4xbf16>
    %1 = vector.shape_cast %0 : vector<1x18x18x4xbf16> to vector<18x18x4xbf16>
    %cst = arith.constant 0.000000e+00 : f32
    %2 = vector.broadcast %cst : f32 to vector<256x128xf32>
    %3 = vector.extract_strided_slice %1 {offsets = [0, 0, 0], sizes = [16, 16, 4], strides = [1, 1, 1]} : vector<18x18x4xbf16> to vector<16x16x4xbf16>
    %4 = vector.shape_cast %3 : vector<16x16x4xbf16> to vector<256x4xbf16>
    %c0_3 = arith.constant 0 : index
    %c0_4 = arith.constant 0 : index
    %c0_5 = arith.constant 0 : index
    %5 = vector.load %arg3[%c0_3, %c0_4, %c0_5] : memref<9x4x128xbf16, #tpu.memory_space<vmem>>, vector<1x4x128xbf16>
    %6 = vector.shape_cast %5 : vector<1x4x128xbf16> to vector<4x128xbf16>
    %cst_6 = arith.constant dense<0.000000e+00> : vector<256x128xf32>
    %7 = tpu.matmul %4, %6, %cst_6 {dimension_numbers = #tpu.dot_dimension_numbers<[1], [0], [0], [1], [0, 0, 1, 1], [], []>} : vector<256x4xbf16>, vector<4x128xbf16>, vector<256x128xf32> -> vector<256x128xf32>
    %8 = arith.addf %2, %7 : vector<256x128xf32>
    %9 = vector.extract_strided_slice %1 {offsets = [0, 1, 0], sizes = [16, 16, 4], strides = [1, 1, 1]} : vector<18x18x4xbf16> to vector<16x16x4xbf16>
    %10 = vector.shape_cast %9 : vector<16x16x4xbf16> to vector<256x4xbf16>
    %c1 = arith.constant 1 : index
    %c0_7 = arith.constant 0 : index
    %c0_8 = arith.constant 0 : index
    %11 = vector.load %arg3[%c1, %c0_7, %c0_8] : memref<9x4x128xbf16, #tpu.memory_space<vmem>>, vector<1x4x128xbf16>
    %12 = vector.shape_cast %11 : vector<1x4x128xbf16> to vector<4x128xbf16>
    %cst_9 = arith.constant dense<0.000000e+00> : vector<256x128xf32>
    %13 = tpu.matmul %10, %12, %cst_9 {dimension_numbers = #tpu.dot_dimension_numbers<[1], [0], [0], [1], [0, 0, 1, 1], [], []>} : vector<256x4xbf16>, vector<4x128xbf16>, vector<256x128xf32> -> vector<256x128xf32>
    %14 = arith.addf %8, %13 : vector<256x128xf32>
    %15 = vector.extract_strided_slice %1 {offsets = [0, 2, 0], sizes = [16, 16, 4], strides = [1, 1, 1]} : vector<18x18x4xbf16> to vector<16x16x4xbf16>
    %16 = vector.shape_cast %15 : vector<16x16x4xbf16> to vector<256x4xbf16>
    %c2 = arith.constant 2 : index
    %c0_10 = arith.constant 0 : index
    %c0_11 = arith.constant 0 : index
    %17 = vector.load %arg3[%c2, %c0_10, %c0_11] : memref<9x4x128xbf16, #tpu.memory_space<vmem>>, vector<1x4x128xbf16>
    %18 = vector.shape_cast %17 : vector<1x4x128xbf16> to vector<4x128xbf16>
    %cst_12 = arith.constant dense<0.000000e+00> : vector<256x128xf32>
    %19 = tpu.matmul %16, %18, %cst_12 {dimension_numbers = #tpu.dot_dimension_numbers<[1], [0], [0], [1], [0, 0, 1, 1], [], []>} : vector<256x4xbf16>, vector<4x128xbf16>, vector<256x128xf32> -> vector<256x128xf32>
    %20 = arith.addf %14, %19 : vector<256x128xf32>
    %21 = vector.extract_strided_slice %1 {offsets = [1, 0, 0], sizes = [16, 16, 4], strides = [1, 1, 1]} : vector<18x18x4xbf16> to vector<16x16x4xbf16>
    %22 = vector.shape_cast %21 : vector<16x16x4xbf16> to vector<256x4xbf16>
    %c3 = arith.constant 3 : index
    %c0_13 = arith.constant 0 : index
    %c0_14 = arith.constant 0 : index
    %23 = vector.load %arg3[%c3, %c0_13, %c0_14] : memref<9x4x128xbf16, #tpu.memory_space<vmem>>, vector<1x4x128xbf16>
    %24 = vector.shape_cast %23 : vector<1x4x128xbf16> to vector<4x128xbf16>
    %cst_15 = arith.constant dense<0.000000e+00> : vector<256x128xf32>
    %25 = tpu.matmul %22, %24, %cst_15 {dimension_numbers = #tpu.dot_dimension_numbers<[1], [0], [0], [1], [0, 0, 1, 1], [], []>} : vector<256x4xbf16>, vector<4x128xbf16>, vector<256x128xf32> -> vector<256x128xf32>
    %26 = arith.addf %20, %25 : vector<256x128xf32>
    %27 = vector.extract_strided_slice %1 {offsets = [1, 1, 0], sizes = [16, 16, 4], strides = [1, 1, 1]} : vector<18x18x4xbf16> to vector<16x16x4xbf16>
    %28 = vector.shape_cast %27 : vector<16x16x4xbf16> to vector<256x4xbf16>
    %c4 = arith.constant 4 : index
    %c0_16 = arith.constant 0 : index
    %c0_17 = arith.constant 0 : index
    %29 = vector.load %arg3[%c4, %c0_16, %c0_17] : memref<9x4x128xbf16, #tpu.memory_space<vmem>>, vector<1x4x128xbf16>
    %30 = vector.shape_cast %29 : vector<1x4x128xbf16> to vector<4x128xbf16>
    %cst_18 = arith.constant dense<0.000000e+00> : vector<256x128xf32>
    %31 = tpu.matmul %28, %30, %cst_18 {dimension_numbers = #tpu.dot_dimension_numbers<[1], [0], [0], [1], [0, 0, 1, 1], [], []>} : vector<256x4xbf16>, vector<4x128xbf16>, vector<256x128xf32> -> vector<256x128xf32>
    %32 = arith.addf %26, %31 : vector<256x128xf32>
    %33 = vector.extract_strided_slice %1 {offsets = [1, 2, 0], sizes = [16, 16, 4], strides = [1, 1, 1]} : vector<18x18x4xbf16> to vector<16x16x4xbf16>
    %34 = vector.shape_cast %33 : vector<16x16x4xbf16> to vector<256x4xbf16>
    %c5 = arith.constant 5 : index
    %c0_19 = arith.constant 0 : index
    %c0_20 = arith.constant 0 : index
    %35 = vector.load %arg3[%c5, %c0_19, %c0_20] : memref<9x4x128xbf16, #tpu.memory_space<vmem>>, vector<1x4x128xbf16>
    %36 = vector.shape_cast %35 : vector<1x4x128xbf16> to vector<4x128xbf16>
    %cst_21 = arith.constant dense<0.000000e+00> : vector<256x128xf32>
    %37 = tpu.matmul %34, %36, %cst_21 {dimension_numbers = #tpu.dot_dimension_numbers<[1], [0], [0], [1], [0, 0, 1, 1], [], []>} : vector<256x4xbf16>, vector<4x128xbf16>, vector<256x128xf32> -> vector<256x128xf32>
    %38 = arith.addf %32, %37 : vector<256x128xf32>
    %39 = vector.extract_strided_slice %1 {offsets = [2, 0, 0], sizes = [16, 16, 4], strides = [1, 1, 1]} : vector<18x18x4xbf16> to vector<16x16x4xbf16>
    %40 = vector.shape_cast %39 : vector<16x16x4xbf16> to vector<256x4xbf16>
    %c6 = arith.constant 6 : index
    %c0_22 = arith.constant 0 : index
    %c0_23 = arith.constant 0 : index
    %41 = vector.load %arg3[%c6, %c0_22, %c0_23] : memref<9x4x128xbf16, #tpu.memory_space<vmem>>, vector<1x4x128xbf16>
    %42 = vector.shape_cast %41 : vector<1x4x128xbf16> to vector<4x128xbf16>
    %cst_24 = arith.constant dense<0.000000e+00> : vector<256x128xf32>
    %43 = tpu.matmul %40, %42, %cst_24 {dimension_numbers = #tpu.dot_dimension_numbers<[1], [0], [0], [1], [0, 0, 1, 1], [], []>} : vector<256x4xbf16>, vector<4x128xbf16>, vector<256x128xf32> -> vector<256x128xf32>
    %44 = arith.addf %38, %43 : vector<256x128xf32>
    %45 = vector.extract_strided_slice %1 {offsets = [2, 1, 0], sizes = [16, 16, 4], strides = [1, 1, 1]} : vector<18x18x4xbf16> to vector<16x16x4xbf16>
    %46 = vector.shape_cast %45 : vector<16x16x4xbf16> to vector<256x4xbf16>
    %c7 = arith.constant 7 : index
    %c0_25 = arith.constant 0 : index
    %c0_26 = arith.constant 0 : index
    %47 = vector.load %arg3[%c7, %c0_25, %c0_26] : memref<9x4x128xbf16, #tpu.memory_space<vmem>>, vector<1x4x128xbf16>
    %48 = vector.shape_cast %47 : vector<1x4x128xbf16> to vector<4x128xbf16>
    %cst_27 = arith.constant dense<0.000000e+00> : vector<256x128xf32>
    %49 = tpu.matmul %46, %48, %cst_27 {dimension_numbers = #tpu.dot_dimension_numbers<[1], [0], [0], [1], [0, 0, 1, 1], [], []>} : vector<256x4xbf16>, vector<4x128xbf16>, vector<256x128xf32> -> vector<256x128xf32>
    %50 = arith.addf %44, %49 : vector<256x128xf32>
    %51 = vector.extract_strided_slice %1 {offsets = [2, 2, 0], sizes = [16, 16, 4], strides = [1, 1, 1]} : vector<18x18x4xbf16> to vector<16x16x4xbf16>
    %52 = vector.shape_cast %51 : vector<16x16x4xbf16> to vector<256x4xbf16>
    %c8 = arith.constant 8 : index
    %c0_28 = arith.constant 0 : index
    %c0_29 = arith.constant 0 : index
    %53 = vector.load %arg3[%c8, %c0_28, %c0_29] : memref<9x4x128xbf16, #tpu.memory_space<vmem>>, vector<1x4x128xbf16>
    %54 = vector.shape_cast %53 : vector<1x4x128xbf16> to vector<4x128xbf16>
    %cst_30 = arith.constant dense<0.000000e+00> : vector<256x128xf32>
    %55 = tpu.matmul %52, %54, %cst_30 {dimension_numbers = #tpu.dot_dimension_numbers<[1], [0], [0], [1], [0, 0, 1, 1], [], []>} : vector<256x4xbf16>, vector<4x128xbf16>, vector<256x128xf32> -> vector<256x128xf32>
    %56 = arith.addf %50, %55 : vector<256x128xf32>
    %c0_31 = arith.constant 0 : index
    %c0_32 = arith.constant 0 : index
    %57 = vector.load %arg4[%c0_31, %c0_32] : memref<1x128xf32, #tpu.memory_space<vmem>>, vector<1x128xf32>
    %58 = vector.broadcast %57 : vector<1x128xf32> to vector<256x128xf32>
    %59 = arith.addf %56, %58 : vector<256x128xf32>
    %cst_33 = arith.constant 0.000000e+00 : f32
    %60 = vector.broadcast %cst_33 : f32 to vector<256x128xf32>
    %61 = arith.maximumf %59, %60 : vector<256x128xf32>
    %62 = arith.truncf %61 : vector<256x128xf32> to vector<256x128xbf16>
    %c0_34 = arith.constant 0 : index
    %c0_35 = arith.constant 0 : index
    %c0_36 = arith.constant 0 : index
    %63 = vector.load %arg5[%c0_34, %c0_35, %c0_36] : memref<1x256x128xbf16, #tpu.memory_space<vmem>>, vector<1x256x128xbf16>
    %64 = vector.shape_cast %63 : vector<1x256x128xbf16> to vector<256x128xbf16>
    %65 = vector.shape_cast %62 : vector<256x128xbf16> to vector<1x256x128xbf16>
    tpu.vector_store %arg5[%c0_34, %c0_35, %c0_36], %65 {strides = array<i32>} : memref<1x256x128xbf16, #tpu.memory_space<vmem>>, vector<1x256x128xbf16>,
    return
  }
  func.func @transform_0(%arg0: i32, %arg1: i32) -> (i32, i32, i32, i32) {
    %c0_i32 = arith.constant 0 : i32
    %c0_i32_0 = arith.constant 0 : i32
    %c0_i32_1 = arith.constant 0 : i32
    %c0_i32_2 = arith.constant 0 : i32
    return %arg0, %c0_i32, %c0_i32_0, %c0_i32_1 : i32, i32, i32, i32
  }
  func.func @transform_1(%arg0: i32, %arg1: i32) -> (i32, i32, i32) {
    %c0_i32 = arith.constant 0 : i32
    %c0_i32_0 = arith.constant 0 : i32
    %c0_i32_1 = arith.constant 0 : i32
    return %c0_i32, %c0_i32_0, %arg1 : i32, i32, i32
  }
  func.func @transform_2(%arg0: i32, %arg1: i32) -> (i32, i32) {
    %c0_i32 = arith.constant 0 : i32
    %c0_i32_0 = arith.constant 0 : i32
    return %c0_i32, %arg1 : i32, i32
  }
  func.func @transform_3(%arg0: i32, %arg1: i32) -> (i32, i32, i32) {
    %c0_i32 = arith.constant 0 : i32
    %c0_i32_0 = arith.constant 0 : i32
    return %arg0, %c0_i32, %arg1 : i32, i32, i32
  }
}

</mosaic_0001>

<llo_original>
// kernel: tpu_custom_call.1
$region0: #{tpu_custom_call.1}
  #allocation0 [shape = 'u32[]', space=smem, size = 0x4, offset = 0x4, fixed_abs, tag = 'smem constant byte address 0x4 - core index']
  #allocation1 [shape = 'u32[144,128]{1,0:T(1,128)}', space=vmem, size = 0x12000, scoped, tag = 'internal scratch']
  %s0 = inlined_call_operand.vmem [shape: bf16[2,18,18,4], index: 0, kind: input, shape index: {}]
  %s1 = inlined_call_operand.vmem [shape: bf16[9,4,128], index: 1, kind: input, shape index: {}]
  %s2 = inlined_call_operand.vmem [shape: f32[1,128], index: 2, kind: input, shape index: {}]
  %s3 = inlined_call_operand.hbm [shape: bf16[2,256,128], index: 3, kind: output, shape index: {}]
  %s4 = sld [smem:[#allocation0]]
  $region45: #{tpu_custom_call.1} parent=0
    _
  %s6 = ssub.s32 1, %s4
  %s7 = scalar_select 0, %s6, %s4
  $region1: #{tpu_custom_call.1} parent=0
    #allocation2 [shape = 'u8[131072]{0}', space=vmem, size = 0x20000, scoped, tag = 'output window, operand 0']
    #allocation3 [shape = 's32[2]{0}', space=sflag, size = 0x8, scoped, tag = 'scoped memory for tpu_custom_call.1']
    %8 = vsyncpa [#allocation3], 0
    %s9 = scalar_lea.sflag [#allocation3], 1
    %10 = vsyncpa %s9, 0
    loop: start=0, step=1, limit=4
    $region2: #{tpu_custom_call.1} parent=1 // loop_pre_header
      _
    $region3: #{tpu_custom_call.1} parent=1 // loop_header
      %s12 = sphi 0, %s16
      %p13 = scmp.ge.s32.totalorder %s12, 4
      %s19 = sphi 0, %s31
      %s20 = sphi 0, %s27
      %s21 = sphi 0, %s19
      %s22 = sphi 0, %s20
      %s23 = sphi 0, %s21
      %s24 = sphi 0, %s22
      %s34 = sphi 0, %s36
      %s37 = sphi 0, %s34
      %s38 = sphi 0, %s37
      %s54 = sphi 0, %s38
      %s60 = sphi 0, %s62
      %s63 = sphi 0, %s60
      %s64 = sphi 0, %s63
      %s80 = sphi 0, %s64
      %s86 = sphi 0, %s88
      %s89 = sphi 0, %s86
      %s90 = sphi 0, %s89
      %s106 = sphi 0, %s90
      %s114 = sphi 0, %s116
      %s117 = sphi 0, %s114
      %s118 = sphi 0, %s117
      %s134 = sphi 0, %s118
    $region4: #{tpu_custom_call.1} parent=1 // loop_header_branch
      %15 = sbr.rel (%p13) target = $region8
    $region5: #{tpu_custom_call.1} parent=1 // loop_body
      %s17 = ssub.s32 %s12, 1
      %s18 = ssub.s32 %s12, 2
      %s25 = sadd.s32 1, %s20
      %p26 = scmp.ge.s32.totalorder %s25, 1
      %s27 = scalar_select %p26, 0, %s25
      %s28 = sadd.s32 1, %s19
      %s29 = scalar_select %p26, %s28, %s19
      %p30 = scmp.ge.s32.totalorder %s29, 2
      %s31 = scalar_select %p30, 0, %s29
      %s32 = ssub.s32 %s19, %s31
      %p33 = scmp.eq.s32.totalorder %s32, 0
      %s35 = sadd.s32 %s34, 1
      %s36 = scalar_select %p33, %s34, %s35
      %p39 = pneg %p33
      %p40 = scmp.eq.s32.totalorder %s12, 1
      %p41 = por %p39, %p40
      %p42 = scmp.ne.s32.totalorder %s34, %s37
      %p43 = scmp.eq.s32.totalorder %s12, 0
      %p44 = por %p42, %p43
      %p45 = scmp.ne.s32.totalorder %s34, %s37
      %p46 = scmp.eq.s32.totalorder %s17, 1
      %p47 = por %p45, %p46
      %p48 = scmp.ne.s32.totalorder %s37, %s38
      %p49 = scmp.eq.s32.totalorder %s17, 0
      %p50 = por %p48, %p49
      %p51 = scmp.ne.s32.totalorder %s37, %s38
      %p52 = scmp.eq.s32.totalorder %s18, 1
      %p53 = por %p51, %p52
      %p55 = scmp.ne.s32.totalorder %s38, %s54
      %p56 = scmp.eq.s32.totalorder %s18, 0
      %p57 = por %p55, %p56
      %s58 = ssub.s32 %s20, %s27
      %p59 = scmp.eq.s32.totalorder %s58, 0
      %s61 = sadd.s32 %s60, 1
      %s62 = scalar_select %p59, %s60, %s61
      %p65 = pneg %p59
      %p66 = scmp.eq.s32.totalorder %s12, 1
      %p67 = por %p65, %p66
      %p68 = scmp.ne.s32.totalorder %s60, %s63
      %p69 = scmp.eq.s32.totalorder %s12, 0
      %p70 = por %p68, %p69
      %p71 = scmp.ne.s32.totalorder %s60, %s63
      %p72 = scmp.eq.s32.totalorder %s17, 1
      %p73 = por %p71, %p72
      %p74 = scmp.ne.s32.totalorder %s63, %s64
      %p75 = scmp.eq.s32.totalorder %s17, 0
      %p76 = por %p74, %p75
      %p77 = scmp.ne.s32.totalorder %s63, %s64
      %p78 = scmp.eq.s32.totalorder %s18, 1
      %p79 = por %p77, %p78
      %p81 = scmp.ne.s32.totalorder %s64, %s80
      %p82 = scmp.eq.s32.totalorder %s18, 0
      %p83 = por %p81, %p82
      %s84 = ssub.s32 %s20, %s27
      %p85 = scmp.eq.s32.totalorder %s84, 0
      %s87 = sadd.s32 %s86, 1
      %s88 = scalar_select %p85, %s86, %s87
      %p91 = pneg %p85
      %p92 = scmp.eq.s32.totalorder %s12, 1
      %p93 = por %p91, %p92
      %p94 = scmp.ne.s32.totalorder %s86, %s89
      %p95 = scmp.eq.s32.totalorder %s12, 0
      %p96 = por %p94, %p95
      %p97 = scmp.ne.s32.totalorder %s86, %s89
      %p98 = scmp.eq.s32.totalorder %s17, 1
      %p99 = por %p97, %p98
      %p100 = scmp.ne.s32.totalorder %s89, %s90
      %p101 = scmp.eq.s32.totalorder %s17, 0
      %p102 = por %p100, %p101
      %p103 = scmp.ne.s32.totalorder %s89, %s90
      %p104 = scmp.eq.s32.totalorder %s18, 1
      %p105 = por %p103, %p104
      %p107 = scmp.ne.s32.totalorder %s90, %s106
      %p108 = scmp.eq.s32.totalorder %s18, 0
      %p109 = por %p107, %p108
      %s110 = ssub.s32 %s19, %s31
      %s111 = ssub.s32 %s20, %s27
      %s112 = sor.u32 %s110, %s111
      %p113 = scmp.eq.s32.totalorder %s112, 0
      %s115 = sadd.s32 %s114, 1
      %s116 = scalar_select %p113, %s114, %s115
      %p119 = pneg %p113
      %p120 = scmp.eq.s32.totalorder %s12, 1
      %p121 = por %p119, %p120
      %p122 = scmp.ne.s32.totalorder %s114, %s117
      %p123 = scmp.eq.s32.totalorder %s12, 0
      %p124 = por %p122, %p123
      %p125 = scmp.ne.s32.totalorder %s114, %s117
      %p126 = scmp.eq.s32.totalorder %s17, 1
      %p127 = por %p125, %p126
      %p128 = scmp.ne.s32.totalorder %s117, %s118
      %p129 = scmp.eq.s32.totalorder %s17, 0
      %p130 = por %p128, %p129
      %p131 = scmp.ne.s32.totalorder %s117, %s118
      %p132 = scmp.eq.s32.totalorder %s18, 1
      %p133 = por %p131, %p132
      %p135 = scmp.ne.s32.totalorder %s118, %s134
      %p136 = scmp.eq.s32.totalorder %s18, 0
      %p137 = por %p135, %p136
      %p138 = scmp.le.s32.totalorder 1, %s12
      %p139 = scmp.lt.s32.totalorder %s12, 3
      %p140 = pnand %p138, %p139
      %p141 = pneg %p140
      // Predicated region
      $region9: #{tpu_custom_call.1} parent=5 // pred_check
        _
      $region10: #{tpu_custom_call.1} parent=5 // pred_check_branch
        %143 = sbr.rel (%p140) target = $region12
      $region11: #{tpu_custom_call.1} parent=5 // pred_region
        %s144 = ssub.s32 %s12, 1
        // Predicated region
        $region13: #{tpu_custom_call.1} parent=11 // pred_check
          %p145 = pneg %p76
        $region14: #{tpu_custom_call.1} parent=11 // pred_check_branch
          %147 = sbr.rel (%p145) target = $region16
        $region15: #{tpu_custom_call.1} parent=11 // pred_region
          %p148 = scmp.lt.s32.totalorder %s22, 0
          %s149 = scalar_select %p148, %s22, 0
          %s150 = smul.addr %s149, 2
          %s151 = scalar_lea.vmem %s1, %s150
        $region16: #{tpu_custom_call.1} parent=11 // pred_fallthru
          _
        // Predicated region
        $region17: #{tpu_custom_call.1} parent=11 // pred_check
          %p152 = pneg %p102
        $region18: #{tpu_custom_call.1} parent=11 // pred_check_branch
          %154 = sbr.rel (%p152) target = $region20
        $region19: #{tpu_custom_call.1} parent=11 // pred_region
          %p155 = scmp.lt.s32.totalorder %s22, 0
          %s156 = scalar_select %p155, %s22, 0
          %s157 = scalar_lea.vmem %s2, %s156
        $region20: #{tpu_custom_call.1} parent=11 // pred_fallthru
          _
      $region12: #{tpu_custom_call.1} parent=5 // pred_fallthru
        _
      %p158 = scmp.lt.s32.totalorder %s12, 2
      // Predicated region
      $region21: #{tpu_custom_call.1} parent=5 // pred_check
        %p159 = pneg %p158
      $region22: #{tpu_custom_call.1} parent=5 // pred_check_branch
        %161 = sbr.rel (%p159) target = $region24
      $region23: #{tpu_custom_call.1} parent=5 // pred_region
        // Predicated region
        $region25: #{tpu_custom_call.1} parent=23 // pred_check
          %p162 = pneg %p44
        $region26: #{tpu_custom_call.1} parent=23 // pred_check_branch
          %164 = sbr.rel (%p162) target = $region28
        $region27: #{tpu_custom_call.1} parent=23 // pred_region
          %p165 = scmp.lt.s32.totalorder %s19, 1
          %s166 = scalar_select %p165, %s19, 1
          %s167 = smul.addr %s166, 54
          %s168 = smul.addr %s167, 4
          %s169 = scalar_lea.vmem %s0, %s168
        $region28: #{tpu_custom_call.1} parent=23 // pred_fallthru
          _
      $region24: #{tpu_custom_call.1} parent=5 // pred_fallthru
        _
      %p170 = scmp.le.s32.totalorder 1, %s12
      %p171 = scmp.lt.s32.totalorder %s12, 3
      %p172 = pnand %p170, %p171
      %p173 = pneg %p172
      // Predicated region
      $region29: #{tpu_custom_call.1} parent=5 // pred_check
        _
      $region30: #{tpu_custom_call.1} parent=5 // pred_check_branch
        %175 = sbr.rel (%p172) target = $region32
      $region31: #{tpu_custom_call.1} parent=5 // pred_region
        %s176 = ssub.s32 %s12, 1
        %p177 = scmp.lt.s32.totalorder %s21, 1
        %s178 = scalar_select %p177, %s21, 1
        %s179 = smul.addr %s178, 54
        %s180 = smul.addr %s179, 4
        %s181 = scalar_lea.vmem %s0, %s180
        %p182 = pneg %p50
        %p183 = pneg %p47
        %p184 = scmp.lt.s32.totalorder %s22, 0
        %s185 = scalar_select %p184, %s22, 0
        %s186 = smul.addr %s185, 2
        %s187 = scalar_lea.vmem %s1, %s186
        %p188 = pneg %p76
        %p189 = pneg %p73
        %p190 = scmp.lt.s32.totalorder %s22, 0
        %s191 = scalar_select %p190, %s22, 0
        %s192 = scalar_lea.vmem %s2, %s191
        %p193 = pneg %p102
        %p194 = pneg %p99
        %p195 = pneg %p130
        %p196 = pneg %p127
        %s197 = sand.u32 %s117, 1
        %s198 = scalar_lea.sflag [#allocation3], %s197
        %s199 = sand.u32 %s117, 1
        %s200 = smul.addr %s199, 128
        %s201 = scalar_lea.vmem [#allocation2], %s200
        %p202 = scmp.lt.s32.totalorder %s21, 1
        %s203 = scalar_select %p202, %s21, 1
        %s204 = smul.addr %s203, 54
        %s205 = smul.addr %s204, 4
        %s206 = scalar_lea.vmem %s0, %s205
        %p207 = scmp.lt.s32.totalorder %s22, 0
        %s208 = scalar_select %p207, %s22, 0
        %s209 = smul.addr %s208, 2
        %s210 = scalar_lea.vmem %s1, %s209
        %p211 = scmp.lt.s32.totalorder %s22, 0
        %s212 = scalar_select %p211, %s22, 0
        %s213 = scalar_lea.vmem %s2, %s212
        %v215 = vld [vmem:[%s206] sm:$0xf]
        %v216 = vld [vmem:[%s206 + $0x4] sm:$0xf]
        %v217 = vld [vmem:[%s206 + $0x8] sm:$0x1]
        %v218 = vld [vmem:[%s206 + $0xc] sm:$0xf]
        %v219 = vld [vmem:[%s206 + $0x10] sm:$0xf]
        %v220 = vld [vmem:[%s206 + $0x14] sm:$0x1]
        %v221 = vld [vmem:[%s206 + $0x18] sm:$0xf]
        %v222 = vld [vmem:[%s206 + $0x1c] sm:$0xf]
        %v223 = vld [vmem:[%s206 + $0x20] sm:$0x1]
        %v224 = vld [vmem:[%s206 + $0x24] sm:$0xf]
        %v225 = vld [vmem:[%s206 + $0x28] sm:$0xf]
        %v226 = vld [vmem:[%s206 + $0x2c] sm:$0x1]
        %v227 = vld [vmem:[%s206 + $0x30] sm:$0xf]
        %v228 = vld [vmem:[%s206 + $0x34] sm:$0xf]
        %v229 = vld [vmem:[%s206 + $0x38] sm:$0x1]
        %v230 = vld [vmem:[%s206 + $0x3c] sm:$0xf]
        %v231 = vld [vmem:[%s206 + $0x40] sm:$0xf]
        %v232 = vld [vmem:[%s206 + $0x44] sm:$0x1]
        %v233 = vld [vmem:[%s206 + $0x48] sm:$0xf]
        %v234 = vld [vmem:[%s206 + $0x4c] sm:$0xf]
        %v235 = vld [vmem:[%s206 + $0x50] sm:$0x1]
        %v236 = vld [vmem:[%s206 + $0x54] sm:$0xf]
        %v237 = vld [vmem:[%s206 + $0x58] sm:$0xf]
        %v238 = vld [vmem:[%s206 + $0x5c] sm:$0x1]
        %v239 = vld [vmem:[%s206 + $0x60] sm:$0xf]
        %v240 = vld [vmem:[%s206 + $0x64] sm:$0xf]
        %v241 = vld [vmem:[%s206 + $0x68] sm:$0x1]
        %v242 = vld [vmem:[%s206 + $0x6c] sm:$0xf]
        %v243 = vld [vmem:[%s206 + $0x70] sm:$0xf]
        %v244 = vld [vmem:[%s206 + $0x74] sm:$0x1]
        %v245 = vld [vmem:[%s206 + $0x78] sm:$0xf]
        %v246 = vld [vmem:[%s206 + $0x7c] sm:$0xf]
        %v247 = vld [vmem:[%s206 + $0x80] sm:$0x1]
        %v248 = vld [vmem:[%s206 + $0x84] sm:$0xf]
        %v249 = vld [vmem:[%s206 + $0x88] sm:$0xf]
        %v250 = vld [vmem:[%s206 + $0x8c] sm:$0x1]
        %v251 = vld [vmem:[%s206 + $0x90] sm:$0xf]
        %v252 = vld [vmem:[%s206 + $0x94] sm:$0xf]
        %v253 = vld [vmem:[%s206 + $0x98] sm:$0x1]
        %v254 = vld [vmem:[%s206 + $0x9c] sm:$0xf]
        %v255 = vld [vmem:[%s206 + $0xa0] sm:$0xf]
        %v256 = vld [vmem:[%s206 + $0xa4] sm:$0x1]
        %v257 = vld [vmem:[%s206 + $0xa8] sm:$0xf]
        %v258 = vld [vmem:[%s206 + $0xac] sm:$0xf]
        %v259 = vld [vmem:[%s206 + $0xb0] sm:$0x1]
        %v260 = vld [vmem:[%s206 + $0xb4] sm:$0xf]
        %v261 = vld [vmem:[%s206 + $0xb8] sm:$0xf]
        %v262 = vld [vmem:[%s206 + $0xbc] sm:$0x1]
        %v263 = vld [vmem:[%s206 + $0xc0] sm:$0xf]
        %v264 = vld [vmem:[%s206 + $0xc4] sm:$0xf]
        %v265 = vld [vmem:[%s206 + $0xc8] sm:$0x1]
        %v266 = vld [vmem:[%s206 + $0xcc] sm:$0xf]
        %v267 = vld [vmem:[%s206 + $0xd0] sm:$0xf]
        %v268 = vld [vmem:[%s206 + $0xd4] sm:$0x1]
        %v269 = vld [vmem:[%s210] sm:$0x3]
        %vm270 = vsmask.f32 3328
        %vm271 = vsmask.f32 7440
        %vm272 = vmor %vm270, %vm271
        %v274 = vshrl.u32 %v215, 16
        %v276 = vrot.slane %v274, 4
        %v277 = vshll.u32 %v215, 16
        %v279 = vrot.slane %v277, 5
        %v280 = vor.u32 %v276, %v279
        %v281 = vrot.slane %v280, 4
        %v283 = vshll.u32 %v216, 16
        %v285 = vrot.slane %v283, 5
        %v286 = vsel %vm272, %v281, %v285
        %v287 = vshrl.u32 %v216, 16
        %v289 = vrot.slane %v287, 4
        %v290 = vor.u32 %v289, %v285
        %v291 = vrot.slane %v290, 4
        %v293 = vshll.u32 %v217, 16
        %v295 = vrot.slane %v293, 5
        %v296 = vsel %vm272, %v291, %v295
        %v298 = vshrl.u32 %v218, 16
        %v300 = vrot.slane %v298, 4
        %v301 = vshll.u32 %v218, 16
        %v303 = vrot.slane %v301, 5
        %v304 = vor.u32 %v300, %v303
        %v305 = vrot.slane %v304, 4
        %v307 = vshll.u32 %v219, 16
        %v309 = vrot.slane %v307, 5
        %v310 = vsel %vm272, %v305, %v309
        %v311 = vshrl.u32 %v219, 16
        %v313 = vrot.slane %v311, 4
        %v314 = vor.u32 %v313, %v309
        %v315 = vrot.slane %v314, 4
        %v317 = vshll.u32 %v220, 16
        %v319 = vrot.slane %v317, 5
        %v320 = vsel %vm272, %v315, %v319
        %v322 = vshrl.u32 %v221, 16
        %v324 = vrot.slane %v322, 4
        %v325 = vshll.u32 %v221, 16
        %v327 = vrot.slane %v325, 5
        %v328 = vor.u32 %v324, %v327
        %v329 = vrot.slane %v328, 4
        %v331 = vshll.u32 %v222, 16
        %v333 = vrot.slane %v331, 5
        %v334 = vsel %vm272, %v329, %v333
        %v335 = vshrl.u32 %v222, 16
        %v337 = vrot.slane %v335, 4
        %v338 = vor.u32 %v337, %v333
        %v339 = vrot.slane %v338, 4
        %v341 = vshll.u32 %v223, 16
        %v343 = vrot.slane %v341, 5
        %v344 = vsel %vm272, %v339, %v343
        %v346 = vshrl.u32 %v224, 16
        %v348 = vrot.slane %v346, 4
        %v349 = vshll.u32 %v224, 16
        %v351 = vrot.slane %v349, 5
        %v352 = vor.u32 %v348, %v351
        %v353 = vrot.slane %v352, 4
        %v355 = vshll.u32 %v225, 16
        %v357 = vrot.slane %v355, 5
        %v358 = vsel %vm272, %v353, %v357
        %v359 = vshrl.u32 %v225, 16
        %v361 = vrot.slane %v359, 4
        %v362 = vor.u32 %v361, %v357
        %v363 = vrot.slane %v362, 4
        %v365 = vshll.u32 %v226, 16
        %v367 = vrot.slane %v365, 5
        %v368 = vsel %vm272, %v363, %v367
        %v370 = vshrl.u32 %v227, 16
        %v372 = vrot.slane %v370, 4
        %v373 = vshll.u32 %v227, 16
        %v375 = vrot.slane %v373, 5
        %v376 = vor.u32 %v372, %v375
        %v377 = vrot.slane %v376, 4
        %v379 = vshll.u32 %v228, 16
        %v381 = vrot.slane %v379, 5
        %v382 = vsel %vm272, %v377, %v381
        %v383 = vshrl.u32 %v228, 16
        %v385 = vrot.slane %v383, 4
        %v386 = vor.u32 %v385, %v381
        %v387 = vrot.slane %v386, 4
        %v389 = vshll.u32 %v229, 16
        %v391 = vrot.slane %v389, 5
        %v392 = vsel %vm272, %v387, %v391
        %v394 = vshrl.u32 %v230, 16
        %v396 = vrot.slane %v394, 4
        %v397 = vshll.u32 %v230, 16
        %v399 = vrot.slane %v397, 5
        %v400 = vor.u32 %v396, %v399
        %v401 = vrot.slane %v400, 4
        %v403 = vshll.u32 %v231, 16
        %v405 = vrot.slane %v403, 5
        %v406 = vsel %vm272, %v401, %v405
        %v407 = vshrl.u32 %v231, 16
        %v409 = vrot.slane %v407, 4
        %v410 = vor.u32 %v409, %v405
        %v411 = vrot.slane %v410, 4
        %v413 = vshll.u32 %v232, 16
        %v415 = vrot.slane %v413, 5
        %v416 = vsel %vm272, %v411, %v415
        %v418 = vshrl.u32 %v233, 16
        %v420 = vrot.slane %v418, 4
        %v421 = vshll.u32 %v233, 16
        %v423 = vrot.slane %v421, 5
        %v424 = vor.u32 %v420, %v423
        %v425 = vrot.slane %v424, 4
        %v427 = vshll.u32 %v234, 16
        %v429 = vrot.slane %v427, 5
        %v430 = vsel %vm272, %v425, %v429
        %v431 = vshrl.u32 %v234, 16
        %v433 = vrot.slane %v431, 4
        %v434 = vor.u32 %v433, %v429
        %v435 = vrot.slane %v434, 4
        %v437 = vshll.u32 %v235, 16
        %v439 = vrot.slane %v437, 5
        %v440 = vsel %vm272, %v435, %v439
        %v442 = vshrl.u32 %v236, 16
        %v444 = vrot.slane %v442, 4
        %v445 = vshll.u32 %v236, 16
        %v447 = vrot.slane %v445, 5
        %v448 = vor.u32 %v444, %v447
        %v449 = vrot.slane %v448, 4
        %v451 = vshll.u32 %v237, 16
        %v453 = vrot.slane %v451, 5
        %v454 = vsel %vm272, %v449, %v453
        %v455 = vshrl.u32 %v237, 16
        %v457 = vrot.slane %v455, 4
        %v458 = vor.u32 %v457, %v453
        %v459 = vrot.slane %v458, 4
        %v461 = vshll.u32 %v238, 16
        %v463 = vrot.slane %v461, 5
        %v464 = vsel %vm272, %v459, %v463
        %v466 = vshrl.u32 %v239, 16
        %v468 = vrot.slane %v466, 4
        %v469 = vshll.u32 %v239, 16
        %v471 = vrot.slane %v469, 5
        %v472 = vor.u32 %v468, %v471
        %v473 = vrot.slane %v472, 4
        %v475 = vshll.u32 %v240, 16
        %v477 = vrot.slane %v475, 5
        %v478 = vsel %vm272, %v473, %v477
        %v479 = vshrl.u32 %v240, 16
        %v481 = vrot.slane %v479, 4
        %v482 = vor.u32 %v481, %v477
        %v483 = vrot.slane %v482, 4
        %v485 = vshll.u32 %v241, 16
        %v487 = vrot.slane %v485, 5
        %v488 = vsel %vm272, %v483, %v487
        %v490 = vshrl.u32 %v242, 16
        %v492 = vrot.slane %v490, 4
        %v493 = vshll.u32 %v242, 16
        %v495 = vrot.slane %v493, 5
        %v496 = vor.u32 %v492, %v495
        %v497 = vrot.slane %v496, 4
        %v499 = vshll.u32 %v243, 16
        %v501 = vrot.slane %v499, 5
        %v502 = vsel %vm272, %v497, %v501
        %v503 = vshrl.u32 %v243, 16
        %v505 = vrot.slane %v503, 4
        %v506 = vor.u32 %v505, %v501
        %v507 = vrot.slane %v506, 4
        %v509 = vshll.u32 %v244, 16
        %v511 = vrot.slane %v509, 5
        %v512 = vsel %vm272, %v507, %v511
        %v514 = vshrl.u32 %v245, 16
        %v516 = vrot.slane %v514, 4
        %v517 = vshll.u32 %v245, 16
        %v519 = vrot.slane %v517, 5
        %v520 = vor.u32 %v516, %v519
        %v521 = vrot.slane %v520, 4
        %v523 = vshll.u32 %v246, 16
        %v525 = vrot.slane %v523, 5
        %v526 = vsel %vm272, %v521, %v525
        %v527 = vshrl.u32 %v246, 16
        %v529 = vrot.slane %v527, 4
        %v530 = vor.u32 %v529, %v525
        %v531 = vrot.slane %v530, 4
        %v533 = vshll.u32 %v247, 16
        %v535 = vrot.slane %v533, 5
        %v536 = vsel %vm272, %v531, %v535
        %v538 = vshrl.u32 %v248, 16
        %v540 = vrot.slane %v538, 4
        %v541 = vshll.u32 %v248, 16
        %v543 = vrot.slane %v541, 5
        %v544 = vor.u32 %v540, %v543
        %v545 = vrot.slane %v544, 4
        %v547 = vshll.u32 %v249, 16
        %v549 = vrot.slane %v547, 5
        %v550 = vsel %vm272, %v545, %v549
        %v551 = vshrl.u32 %v249, 16
        %v553 = vrot.slane %v551, 4
        %v554 = vor.u32 %v553, %v549
        %v555 = vrot.slane %v554, 4
        %v557 = vshll.u32 %v250, 16
        %v559 = vrot.slane %v557, 5
        %v560 = vsel %vm272, %v555, %v559
        %v562 = vshrl.u32 %v251, 16
        %v564 = vrot.slane %v562, 4
        %v565 = vshll.u32 %v251, 16
        %v567 = vrot.slane %v565, 5
        %v568 = vor.u32 %v564, %v567
        %v569 = vrot.slane %v568, 4
        %v571 = vshll.u32 %v252, 16
        %v573 = vrot.slane %v571, 5
        %v574 = vsel %vm272, %v569, %v573
        %v575 = vshrl.u32 %v252, 16
        %v577 = vrot.slane %v575, 4
        %v578 = vor.u32 %v577, %v573
        %v579 = vrot.slane %v578, 4
        %v581 = vshll.u32 %v253, 16
        %v583 = vrot.slane %v581, 5
        %v584 = vsel %vm272, %v579, %v583
        %v586 = vshrl.u32 %v254, 16
        %v588 = vrot.slane %v586, 4
        %v589 = vshll.u32 %v254, 16
        %v591 = vrot.slane %v589, 5
        %v592 = vor.u32 %v588, %v591
        %v593 = vrot.slane %v592, 4
        %v595 = vshll.u32 %v255, 16
        %v597 = vrot.slane %v595, 5
        %v598 = vsel %vm272, %v593, %v597
        %v599 = vshrl.u32 %v255, 16
        %v601 = vrot.slane %v599, 4
        %v602 = vor.u32 %v601, %v597
        %v603 = vrot.slane %v602, 4
        %v605 = vshll.u32 %v256, 16
        %v607 = vrot.slane %v605, 5
        %v608 = vsel %vm272, %v603, %v607
        %v610 = vshrl.u32 %v257, 16
        %v612 = vrot.slane %v610, 4
        %v613 = vshll.u32 %v257, 16
        %v615 = vrot.slane %v613, 5
        %v616 = vor.u32 %v612, %v615
        %v617 = vrot.slane %v616, 4
        %v619 = vshll.u32 %v258, 16
        %v621 = vrot.slane %v619, 5
        %v622 = vsel %vm272, %v617, %v621
        %v623 = vshrl.u32 %v258, 16
        %v625 = vrot.slane %v623, 4
        %v626 = vor.u32 %v625, %v621
        %v627 = vrot.slane %v626, 4
        %v629 = vshll.u32 %v259, 16
        %v631 = vrot.slane %v629, 5
        %v632 = vsel %vm272, %v627, %v631
        %v634 = vshrl.u32 %v260, 16
        %v636 = vrot.slane %v634, 4
        %v637 = vshll.u32 %v260, 16
        %v639 = vrot.slane %v637, 5
        %v640 = vor.u32 %v636, %v639
        %v641 = vrot.slane %v640, 4
        %v643 = vshll.u32 %v261, 16
        %v645 = vrot.slane %v643, 5
        %v646 = vsel %vm272, %v641, %v645
        %v647 = vshrl.u32 %v261, 16
        %v649 = vrot.slane %v647, 4
        %v650 = vor.u32 %v649, %v645
        %v651 = vrot.slane %v650, 4
        %v653 = vshll.u32 %v262, 16
        %v655 = vrot.slane %v653, 5
        %v656 = vsel %vm272, %v651, %v655
        %s657 = scalar_lea.vmem %s210, 2
        %v658 = vld [vmem:[%s657] sm:$0x3]
        %v659 = vunpack.c.l.b16 %v286
        %v660 = vunpack.c.l.b16 %v296
        %v661 = vunpack.c.l.b16 %v310
        %v662 = vunpack.c.l.b16 %v320
        %v663 = vunpack.c.l.b16 %v334
        %v664 = vunpack.c.l.b16 %v344
        %v665 = vunpack.c.l.b16 %v358
        %v666 = vunpack.c.l.b16 %v368
        %v667 = vunpack.c.l.b16 %v382
        %v668 = vunpack.c.l.b16 %v392
        %v669 = vunpack.c.l.b16 %v406
        %v670 = vunpack.c.l.b16 %v416
        %v671 = vunpack.c.l.b16 %v430
        %v672 = vunpack.c.l.b16 %v440
        %v673 = vunpack.c.l.b16 %v454
        %v674 = vunpack.c.l.b16 %v464
        %v675 = vunpack.c.l.b16 %v478
        %v676 = vunpack.c.l.b16 %v488
        %v677 = vunpack.c.l.b16 %v502
        %v678 = vunpack.c.l.b16 %v512
        %v679 = vunpack.c.l.b16 %v526
        %v680 = vunpack.c.l.b16 %v536
        %v681 = vunpack.c.l.b16 %v550
        %v682 = vunpack.c.l.b16 %v560
        %v683 = vunpack.c.l.b16 %v574
        %v684 = vunpack.c.l.b16 %v584
        %v685 = vunpack.c.l.b16 %v598
        %v686 = vunpack.c.l.b16 %v608
        %v687 = vunpack.c.l.b16 %v622
        %v688 = vunpack.c.l.b16 %v632
        %v689 = vunpack.c.l.b16 %v646
        %v690 = vunpack.c.l.b16 %v656
        %v691 = vpack.c.b16 %v660, %v659
        %v692 = vpack.c.b16 %v662, %v661
        %v693 = vpack.c.b16 %v664, %v663
        %v694 = vpack.c.b16 %v666, %v665
        %v695 = vpack.c.b16 %v668, %v667
        %v696 = vpack.c.b16 %v670, %v669
        %v697 = vpack.c.b16 %v672, %v671
        %v698 = vpack.c.b16 %v674, %v673
        %v699 = vpack.c.b16 %v676, %v675
        %v700 = vpack.c.b16 %v678, %v677
        %v701 = vpack.c.b16 %v680, %v679
        %v702 = vpack.c.b16 %v682, %v681
        %v703 = vpack.c.b16 %v684, %v683
        %v704 = vpack.c.b16 %v686, %v685
        %v705 = vpack.c.b16 %v688, %v687
        %v706 = vpack.c.b16 %v690, %v689
        %vm707 = vcmask 31744
        %v709 = vsel %vm707, %v691, 0
        %v712 = vsel %vm707, %v692, 0
        %v715 = vsel %vm707, %v693, 0
        %v718 = vsel %vm707, %v694, 0
        %v721 = vsel %vm707, %v695, 0
        %v724 = vsel %vm707, %v696, 0
        %v727 = vsel %vm707, %v697, 0
        %v730 = vsel %vm707, %v698, 0
        %v733 = vsel %vm707, %v699, 0
        %v736 = vsel %vm707, %v700, 0
        %v739 = vsel %vm707, %v701, 0
        %v742 = vsel %vm707, %v702, 0
        %v745 = vsel %vm707, %v703, 0
        %v748 = vsel %vm707, %v704, 0
        %v751 = vsel %vm707, %v705, 0
        %v754 = vsel %vm707, %v706, 0
        %vm756 = vcmask 1041408
        %v758 = vsel %vm756, %v658, 0
        %760 = vmatprep.subr.bf16.mxu0 0
        %761 = vmatpush1.bf16.msra.mxu0 %v758
        %762 = vmatprep.subr.bf16.mxu0 0
        %763 = vmatpush1.bf16.msra.mxu0 0
        %764 = vmatprep.subr.bf16.mxu0 0
        %765 = vmatpush1.bf16.msra.mxu0 0
        %766 = vmatprep.subr.bf16.mxu0 0
        %767 = vmatpush1.bf16.msra.mxu0 0
        %768 = vmatprep.subr.bf16.mxu0 0
        %769 = vmatpush1.bf16.msra.mxu0 0
        %770 = vmatprep.subr.bf16.mxu0 0
        %771 = vmatpush1.bf16.msra.mxu0 0
        %772 = vmatprep.subr.bf16.mxu0 0
        %773 = vmatpush1.bf16.msra.mxu0 0
        %774 = vmatprep.subr.bf16.mxu0 0
        %775 = vmatpush1.bf16.msra.mxu0 0
        %776 = vmatprep.subr.bf16.mxu0 0
        %777 = vmatpush1.bf16.msra.mxu0 0
        %778 = vmatprep.subr.bf16.mxu0 0
        %779 = vmatpush1.bf16.msra.mxu0 0
        %780 = vmatprep.subr.bf16.mxu0 0
        %781 = vmatpush1.bf16.msra.mxu0 0
        %782 = vmatprep.subr.bf16.mxu0 0
        %783 = vmatpush1.bf16.msra.mxu0 0
        %784 = vmatprep.subr.bf16.mxu0 0
        %785 = vmatpush1.bf16.msra.mxu0 0
        %786 = vmatprep.subr.bf16.mxu0 0
        %787 = vmatpush1.bf16.msra.mxu0 0
        %788 = vmatprep.subr.bf16.mxu0 0
        %789 = vmatpush1.bf16.msra.mxu0 0
        %790 = vmatprep.subr.bf16.mxu0 0
        %791 = vmatpush1.bf16.msra.mxu0 0
        %792 = vmatprep.mubr.bf16.mxu0 0
        %793 = vmatmul.mubr.bf16.gmra.mrb[0].mxu0 %v709
        %v794 = vpop.f32.mrb[0].mxu0
        %v795 = vadd.f32 0.0, %v794
        %v796 = vpop.f32.mrb[0].mxu0
        %v797 = vpop.f32.mrb[0].mxu0
        %v798 = vadd.f32 0.0, %v797
        %v799 = vpop.f32.mrb[0].mxu0
        %800 = vmatprep.mubr.bf16.mxu0 0
        %801 = vmatmul.mubr.bf16.gmra.mrb[0].mxu0 %v712
        %v802 = vpop.f32.mrb[0].mxu0
        %v803 = vadd.f32 0.0, %v802
        %v804 = vpop.f32.mrb[0].mxu0
        %v805 = vpop.f32.mrb[0].mxu0
        %v806 = vadd.f32 0.0, %v805
        %v807 = vpop.f32.mrb[0].mxu0
        %808 = vmatprep.mubr.bf16.mxu0 0
        %809 = vmatmul.mubr.bf16.gmra.mrb[0].mxu0 %v715
        %v810 = vpop.f32.mrb[0].mxu0
        %v811 = vadd.f32 0.0, %v810
        %v812 = vpop.f32.mrb[0].mxu0
        %v813 = vpop.f32.mrb[0].mxu0
        %v814 = vadd.f32 0.0, %v813
        %v815 = vpop.f32.mrb[0].mxu0
        %816 = vmatprep.mubr.bf16.mxu0 0
        %817 = vmatmul.mubr.bf16.gmra.mrb[0].mxu0 %v718
        %v818 = vpop.f32.mrb[0].mxu0
        %v819 = vadd.f32 0.0, %v818
        %v820 = vpop.f32.mrb[0].mxu0
        %v821 = vpop.f32.mrb[0].mxu0
        %v822 = vadd.f32 0.0, %v821
        %v823 = vpop.f32.mrb[0].mxu0
        %824 = vmatprep.mubr.bf16.mxu0 0
        %825 = vmatmul.mubr.bf16.gmra.mrb[0].mxu0 %v721
        %v826 = vpop.f32.mrb[0].mxu0
        %v827 = vadd.f32 0.0, %v826
        %v828 = vpop.f32.mrb[0].mxu0
        %v829 = vpop.f32.mrb[0].mxu0
        %v830 = vadd.f32 0.0, %v829
        %v831 = vpop.f32.mrb[0].mxu0
        %832 = vmatprep.mubr.bf16.mxu0 0
        %833 = vmatmul.mubr.bf16.gmra.mrb[0].mxu0 %v724
        %v834 = vpop.f32.mrb[0].mxu0
        %v835 = vadd.f32 0.0, %v834
        %v836 = vpop.f32.mrb[0].mxu0
        %v837 = vpop.f32.mrb[0].mxu0
        %v838 = vadd.f32 0.0, %v837
        %v839 = vpop.f32.mrb[0].mxu0
        %840 = vmatprep.mubr.bf16.mxu0 0
        %841 = vmatmul.mubr.bf16.gmra.mrb[0].mxu0 %v727
        %v842 = vpop.f32.mrb[0].mxu0
        %v843 = vadd.f32 0.0, %v842
        %v844 = vpop.f32.mrb[0].mxu0
        %v845 = vpop.f32.mrb[0].mxu0
        %v846 = vadd.f32 0.0, %v845
        %v847 = vpop.f32.mrb[0].mxu0
        %848 = vmatprep.mubr.bf16.mxu0 0
        %849 = vmatmul.mubr.bf16.gmra.mrb[0].mxu0 %v730
        %v850 = vpop.f32.mrb[0].mxu0
        %v851 = vadd.f32 0.0, %v850
        %v852 = vpop.f32.mrb[0].mxu0
        %v853 = vpop.f32.mrb[0].mxu0
        %v854 = vadd.f32 0.0, %v853
        %v855 = vpop.f32.mrb[0].mxu0
        %856 = vmatprep.mubr.bf16.mxu0 0
        %857 = vmatmul.mubr.bf16.gmra.mrb[0].mxu0 %v733
        %v858 = vpop.f32.mrb[0].mxu0
        %v859 = vadd.f32 0.0, %v858
        %v860 = vpop.f32.mrb[0].mxu0
        %v861 = vpop.f32.mrb[0].mxu0
        %v862 = vadd.f32 0.0, %v861
        %v863 = vpop.f32.mrb[0].mxu0
        %864 = vmatprep.mubr.bf16.mxu0 0
        %865 = vmatmul.mubr.bf16.gmra.mrb[0].mxu0 %v736
        %v866 = vpop.f32.mrb[0].mxu0
        %v867 = vadd.f32 0.0, %v866
        %v868 = vpop.f32.mrb[0].mxu0
        %v869 = vpop.f32.mrb[0].mxu0
        %v870 = vadd.f32 0.0, %v869
        %v871 = vpop.f32.mrb[0].mxu0
        %872 = vmatprep.mubr.bf16.mxu0 0
        %873 = vmatmul.mubr.bf16.gmra.mrb[0].mxu0 %v739
        %v874 = vpop.f32.mrb[0].mxu0
        %v875 = vadd.f32 0.0, %v874
        %v876 = vpop.f32.mrb[0].mxu0
        %v877 = vpop.f32.mrb[0].mxu0
        %v878 = vadd.f32 0.0, %v877
        %v879 = vpop.f32.mrb[0].mxu0
        %880 = vmatprep.mubr.bf16.mxu0 0
        %881 = vmatmul.mubr.bf16.gmra.mrb[0].mxu0 %v742
        %v882 = vpop.f32.mrb[0].mxu0
        %v883 = vadd.f32 0.0, %v882
        %v884 = vpop.f32.mrb[0].mxu0
        %v885 = vpop.f32.mrb[0].mxu0
        %v886 = vadd.f32 0.0, %v885
        %v887 = vpop.f32.mrb[0].mxu0
        %888 = vmatprep.mubr.bf16.mxu0 0
        %889 = vmatmul.mubr.bf16.gmra.mrb[0].mxu0 %v745
        %v890 = vpop.f32.mrb[0].mxu0
        %v891 = vadd.f32 0.0, %v890
        %v892 = vpop.f32.mrb[0].mxu0
        %v893 = vpop.f32.mrb[0].mxu0
        %v894 = vadd.f32 0.0, %v893
        %v895 = vpop.f32.mrb[0].mxu0
        %896 = vmatprep.mubr.bf16.mxu0 0
        %897 = vmatmul.mubr.bf16.gmra.mrb[0].mxu0 %v748
        %v898 = vpop.f32.mrb[0].mxu0
        %v899 = vadd.f32 0.0, %v898
        %v900 = vpop.f32.mrb[0].mxu0
        %v901 = vpop.f32.mrb[0].mxu0
        %v902 = vadd.f32 0.0, %v901
        %v903 = vpop.f32.mrb[0].mxu0
        %904 = vmatprep.mubr.bf16.mxu0 0
        %905 = vmatmul.mubr.bf16.gmra.mrb[0].mxu0 %v751
        %v906 = vpop.f32.mrb[0].mxu0
        %v907 = vadd.f32 0.0, %v906
        %v908 = vpop.f32.mrb[0].mxu0
        %v909 = vpop.f32.mrb[0].mxu0
        %v910 = vadd.f32 0.0, %v909
        %v911 = vpop.f32.mrb[0].mxu0
        %912 = vmatprep.mubr.bf16.mxu0 0
        %913 = vmatmul.mubr.bf16.gmra.mrb[0].mxu0 %v754
        %v914 = vpop.f32.mrb[0].mxu0
        %v915 = vadd.f32 0.0, %v914
        %v916 = vpop.f32.mrb[0].mxu0
        %v917 = vpop.f32.mrb[0].mxu0
        %v918 = vadd.f32 0.0, %v917
        %v919 = vpop.f32.mrb[0].mxu0
        %920 = vdwg.mxu0
        %v953 = vunpack.c.l.b16 %v215
        %v954 = vunpack.c.l.b16 %v216
        %v955 = vunpack.c.l.b16 %v218
        %v956 = vunpack.c.l.b16 %v219
        %v957 = vunpack.c.l.b16 %v221
        %v958 = vunpack.c.l.b16 %v222
        %v959 = vunpack.c.l.b16 %v224
        %v960 = vunpack.c.l.b16 %v225
        %v961 = vunpack.c.l.b16 %v227
        %v962 = vunpack.c.l.b16 %v228
        %v963 = vunpack.c.l.b16 %v230
        %v964 = vunpack.c.l.b16 %v231
        %v965 = vunpack.c.l.b16 %v233
        %v966 = vunpack.c.l.b16 %v234
        %v967 = vunpack.c.l.b16 %v236
        %v968 = vunpack.c.l.b16 %v237
        %v969 = vunpack.c.l.b16 %v239
        %v970 = vunpack.c.l.b16 %v240
        %v971 = vunpack.c.l.b16 %v242
        %v972 = vunpack.c.l.b16 %v243
        %v973 = vunpack.c.l.b16 %v245
        %v974 = vunpack.c.l.b16 %v246
        %v975 = vunpack.c.l.b16 %v248
        %v976 = vunpack.c.l.b16 %v249
        %v977 = vunpack.c.l.b16 %v251
        %v978 = vunpack.c.l.b16 %v252
        %v979 = vunpack.c.l.b16 %v254
        %v980 = vunpack.c.l.b16 %v255
        %v981 = vunpack.c.l.b16 %v257
        %v982 = vunpack.c.l.b16 %v258
        %v983 = vunpack.c.l.b16 %v260
        %v984 = vunpack.c.l.b16 %v261
        %v985 = vpack.c.b16 %v954, %v953
        %v986 = vpack.c.b16 %v956, %v955
        %v987 = vpack.c.b16 %v958, %v957
        %v988 = vpack.c.b16 %v960, %v959
        %v989 = vpack.c.b16 %v962, %v961
        %v990 = vpack.c.b16 %v964, %v963
        %v991 = vpack.c.b16 %v966, %v965
        %v992 = vpack.c.b16 %v968, %v967
        %v993 = vpack.c.b16 %v970, %v969
        %v994 = vpack.c.b16 %v972, %v971
        %v995 = vpack.c.b16 %v974, %v973
        %v996 = vpack.c.b16 %v976, %v975
        %v997 = vpack.c.b16 %v978, %v977
        %v998 = vpack.c.b16 %v980, %v979
        %v999 = vpack.c.b16 %v982, %v981
        %v1000 = vpack.c.b16 %v984, %v983
        %v1002 = vsel %vm707, %v985, 0
        %v1005 = vsel %vm707, %v986, 0
        %v1008 = vsel %vm707, %v987, 0
        %v1011 = vsel %vm707, %v988, 0
        %v1014 = vsel %vm707, %v989, 0
        %v1017 = vsel %vm707, %v990, 0
        %v1020 = vsel %vm707, %v991, 0
        %v1023 = vsel %vm707, %v992, 0
        %v1026 = vsel %vm707, %v993, 0
        %v1029 = vsel %vm707, %v994, 0
        %v1032 = vsel %vm707, %v995, 0
        %v1035 = vsel %vm707, %v996, 0
        %v1038 = vsel %vm707, %v997, 0
        %v1041 = vsel %vm707, %v998, 0
        %v1044 = vsel %vm707, %v999, 0
        %v1047 = vsel %vm707, %v1000, 0
        %v1050 = vsel %vm756, %v269, 0
        %1052 = vmatprep.subr.bf16.mxu0 0
        %1053 = vmatpush1.bf16.msra.mxu0 %v1050
        %1054 = vmatprep.subr.bf16.mxu0 0
        %1055 = vmatpush1.bf16.msra.mxu0 0
        %1056 = vmatprep.subr.bf16.mxu0 0
        %1057 = vmatpush1.bf16.msra.mxu0 0
        %1058 = vmatprep.subr.bf16.mxu0 0
        %1059 = vmatpush1.bf16.msra.mxu0 0
        %1060 = vmatprep.subr.bf16.mxu0 0
        %1061 = vmatpush1.bf16.msra.mxu0 0
        %1062 = vmatprep.subr.bf16.mxu0 0
        %1063 = vmatpush1.bf16.msra.mxu0 0
        %1064 = vmatprep.subr.bf16.mxu0 0
        %1065 = vmatpush1.bf16.msra.mxu0 0
        %1066 = vmatprep.subr.bf16.mxu0 0
        %1067 = vmatpush1.bf16.msra.mxu0 0
        %1068 = vmatprep.subr.bf16.mxu0 0
        %1069 = vmatpush1.bf16.msra.mxu0 0
        %1070 = vmatprep.subr.bf16.mxu0 0
        %1071 = vmatpush1.bf16.msra.mxu0 0
        %1072 = vmatprep.subr.bf16.mxu0 0
        %1073 = vmatpush1.bf16.msra.mxu0 0
        %1074 = vmatprep.subr.bf16.mxu0 0
        %1075 = vmatpush1.bf16.msra.mxu0 0
        %1076 = vmatprep.subr.bf16.mxu0 0
        %1077 = vmatpush1.bf16.msra.mxu0 0
        %1078 = vmatprep.subr.bf16.mxu0 0
        %1079 = vmatpush1.bf16.msra.mxu0 0
        %1080 = vmatprep.subr.bf16.mxu0 0
        %1081 = vmatpush1.bf16.msra.mxu0 0
        %1082 = vmatprep.subr.bf16.mxu0 0
        %1083 = vmatpush1.bf16.msra.mxu0 0
        %1084 = vmatprep.mubr.bf16.mxu0 0
        %1085 = vmatmul.mubr.bf16.gmra.mrb[0].mxu0 %v1002
        %v1086 = vpop.f32.mrb[0].mxu0
        %v1087 = vadd.f32 %v795, %v1086
        %v1088 = vpop.f32.mrb[0].mxu0
        %v1089 = vpop.f32.mrb[0].mxu0
        %v1090 = vadd.f32 %v798, %v1089
        %v1091 = vpop.f32.mrb[0].mxu0
        %1092 = vmatprep.mubr.bf16.mxu0 0
        %1093 = vmatmul.mubr.bf16.gmra.mrb[0].mxu0 %v1005
        %v1094 = vpop.f32.mrb[0].mxu0
        %v1095 = vadd.f32 %v803, %v1094
        %v1096 = vpop.f32.mrb[0].mxu0
        %v1097 = vpop.f32.mrb[0].mxu0
        %v1098 = vadd.f32 %v806, %v1097
        %v1099 = vpop.f32.mrb[0].mxu0
        %1100 = vmatprep.mubr.bf16.mxu0 0
        %1101 = vmatmul.mubr.bf16.gmra.mrb[0].mxu0 %v1008
        %v1102 = vpop.f32.mrb[0].mxu0
        %v1103 = vadd.f32 %v811, %v1102
        %v1104 = vpop.f32.mrb[0].mxu0
        %v1105 = vpop.f32.mrb[0].mxu0
        %v1106 = vadd.f32 %v814, %v1105
        %v1107 = vpop.f32.mrb[0].mxu0
        %1108 = vmatprep.mubr.bf16.mxu0 0
        %1109 = vmatmul.mubr.bf16.gmra.mrb[0].mxu0 %v1011
        %v1110 = vpop.f32.mrb[0].mxu0
        %v1111 = vadd.f32 %v819, %v1110
        %v1112 = vpop.f32.mrb[0].mxu0
        %v1113 = vpop.f32.mrb[0].mxu0
        %v1114 = vadd.f32 %v822, %v1113
        %v1115 = vpop.f32.mrb[0].mxu0
        %1116 = vmatprep.mubr.bf16.mxu0 0
        %1117 = vmatmul.mubr.bf16.gmra.mrb[0].mxu0 %v1014
        %v1118 = vpop.f32.mrb[0].mxu0
        %v1119 = vadd.f32 %v827, %v1118
        %v1120 = vpop.f32.mrb[0].mxu0
        %v1121 = vpop.f32.mrb[0].mxu0
        %v1122 = vadd.f32 %v830, %v1121
        %v1123 = vpop.f32.mrb[0].mxu0
        %1124 = vmatprep.mubr.bf16.mxu0 0
        %1125 = vmatmul.mubr.bf16.gmra.mrb[0].mxu0 %v1017
        %v1126 = vpop.f32.mrb[0].mxu0
        %v1127 = vadd.f32 %v835, %v1126
        %v1128 = vpop.f32.mrb[0].mxu0
        %v1129 = vpop.f32.mrb[0].mxu0
        %v1130 = vadd.f32 %v838, %v1129
        %v1131 = vpop.f32.mrb[0].mxu0
        %1132 = vmatprep.mubr.bf16.mxu0 0
        %1133 = vmatmul.mubr.bf16.gmra.mrb[0].mxu0 %v1020
        %v1134 = vpop.f32.mrb[0].mxu0
        %v1135 = vadd.f32 %v843, %v1134
        %v1136 = vpop.f32.mrb[0].mxu0
        %v1137 = vpop.f32.mrb[0].mxu0
        %v1138 = vadd.f32 %v846, %v1137
        %v1139 = vpop.f32.mrb[0].mxu0
        %1140 = vmatprep.mubr.bf16.mxu0 0
        %1141 = vmatmul.mubr.bf16.gmra.mrb[0].mxu0 %v1023
        %v1142 = vpop.f32.mrb[0].mxu0
        %v1143 = vadd.f32 %v851, %v1142
        %v1144 = vpop.f32.mrb[0].mxu0
        %v1145 = vpop.f32.mrb[0].mxu0
        %v1146 = vadd.f32 %v854, %v1145
        %v1147 = vpop.f32.mrb[0].mxu0
        %1148 = vmatprep.mubr.bf16.mxu0 0
        %1149 = vmatmul.mubr.bf16.gmra.mrb[0].mxu0 %v1026
        %v1150 = vpop.f32.mrb[0].mxu0
        %v1151 = vadd.f32 %v859, %v1150
        %v1152 = vpop.f32.mrb[0].mxu0
        %v1153 = vpop.f32.mrb[0].mxu0
        %v1154 = vadd.f32 %v862, %v1153
        %v1155 = vpop.f32.mrb[0].mxu0
        %1156 = vmatprep.mubr.bf16.mxu0 0
        %1157 = vmatmul.mubr.bf16.gmra.mrb[0].mxu0 %v1029
        %v1158 = vpop.f32.mrb[0].mxu0
        %v1159 = vadd.f32 %v867, %v1158
        %v1160 = vpop.f32.mrb[0].mxu0
        %v1161 = vpop.f32.mrb[0].mxu0
        %v1162 = vadd.f32 %v870, %v1161
        %v1163 = vpop.f32.mrb[0].mxu0
        %1164 = vmatprep.mubr.bf16.mxu0 0
        %1165 = vmatmul.mubr.bf16.gmra.mrb[0].mxu0 %v1032
        %v1166 = vpop.f32.mrb[0].mxu0
        %v1167 = vadd.f32 %v875, %v1166
        %v1168 = vpop.f32.mrb[0].mxu0
        %v1169 = vpop.f32.mrb[0].mxu0
        %v1170 = vadd.f32 %v878, %v1169
        %v1171 = vpop.f32.mrb[0].mxu0
        %1172 = vmatprep.mubr.bf16.mxu0 0
        %1173 = vmatmul.mubr.bf16.gmra.mrb[0].mxu0 %v1035
        %v1174 = vpop.f32.mrb[0].mxu0
        %v1175 = vadd.f32 %v883, %v1174
        %v1176 = vpop.f32.mrb[0].mxu0
        %v1177 = vpop.f32.mrb[0].mxu0
        %v1178 = vadd.f32 %v886, %v1177
        %v1179 = vpop.f32.mrb[0].mxu0
        %1180 = vmatprep.mubr.bf16.mxu0 0
        %1181 = vmatmul.mubr.bf16.gmra.mrb[0].mxu0 %v1038
        %v1182 = vpop.f32.mrb[0].mxu0
        %v1183 = vadd.f32 %v891, %v1182
        %v1184 = vpop.f32.mrb[0].mxu0
        %v1185 = vpop.f32.mrb[0].mxu0
        %v1186 = vadd.f32 %v894, %v1185
        %v1187 = vpop.f32.mrb[0].mxu0
        %1188 = vmatprep.mubr.bf16.mxu0 0
        %1189 = vmatmul.mubr.bf16.gmra.mrb[0].mxu0 %v1041
        %v1190 = vpop.f32.mrb[0].mxu0
        %v1191 = vadd.f32 %v899, %v1190
        %v1192 = vpop.f32.mrb[0].mxu0
        %v1193 = vpop.f32.mrb[0].mxu0
        %v1194 = vadd.f32 %v902, %v1193
        %v1195 = vpop.f32.mrb[0].mxu0
        %1196 = vmatprep.mubr.bf16.mxu0 0
        %1197 = vmatmul.mubr.bf16.gmra.mrb[0].mxu0 %v1044
        %v1198 = vpop.f32.mrb[0].mxu0
        %v1199 = vadd.f32 %v907, %v1198
        %v1200 = vpop.f32.mrb[0].mxu0
        %v1201 = vpop.f32.mrb[0].mxu0
        %v1202 = vadd.f32 %v910, %v1201
        %v1203 = vpop.f32.mrb[0].mxu0
        %1204 = vmatprep.mubr.bf16.mxu0 0
        %1205 = vmatmul.mubr.bf16.gmra.mrb[0].mxu0 %v1047
        %v1206 = vpop.f32.mrb[0].mxu0
        %v1207 = vadd.f32 %v915, %v1206
        %v1208 = vpop.f32.mrb[0].mxu0
        %v1209 = vpop.f32.mrb[0].mxu0
        %v1210 = vadd.f32 %v918, %v1209
        %v1211 = vpop.f32.mrb[0].mxu0
        %1212 = vdwg.mxu0
        %vm1229 = vcmask 1042432
        %vm1230 = vcmask 1046532
        %vm1231 = vmor %vm1229, %vm1230
        %v1232 = vrot.slane %v215, 5
        %v1233 = vrot.slane %v1232, 4
        %v1234 = vrot.slane %v216, 5
        %v1235 = vsel %vm1231, %v1233, %v1234
        %v1236 = vrot.slane %v1234, 4
        %v1237 = vrot.slane %v217, 5
        %v1238 = vsel %vm1231, %v1236, %v1237
        %v1239 = vrot.slane %v218, 5
        %v1240 = vrot.slane %v1239, 4
        %v1241 = vrot.slane %v219, 5
        %v1242 = vsel %vm1231, %v1240, %v1241
        %v1243 = vrot.slane %v1241, 4
        %v1244 = vrot.slane %v220, 5
        %v1245 = vsel %vm1231, %v1243, %v1244
        %v1246 = vrot.slane %v221, 5
        %v1247 = vrot.slane %v1246, 4
        %v1248 = vrot.slane %v222, 5
        %v1249 = vsel %vm1231, %v1247, %v1248
        %v1250 = vrot.slane %v1248, 4
        %v1251 = vrot.slane %v223, 5
        %v1252 = vsel %vm1231, %v1250, %v1251
        %v1253 = vrot.slane %v224, 5
        %v1254 = vrot.slane %v1253, 4
        %v1255 = vrot.slane %v225, 5
        %v1256 = vsel %vm1231, %v1254, %v1255
        %v1257 = vrot.slane %v1255, 4
        %v1258 = vrot.slane %v226, 5
        %v1259 = vsel %vm1231, %v1257, %v1258
        %v1260 = vrot.slane %v227, 5
        %v1261 = vrot.slane %v1260, 4
        %v1262 = vrot.slane %v228, 5
        %v1263 = vsel %vm1231, %v1261, %v1262
        %v1264 = vrot.slane %v1262, 4
        %v1265 = vrot.slane %v229, 5
        %v1266 = vsel %vm1231, %v1264, %v1265
        %v1267 = vrot.slane %v230, 5
        %v1268 = vrot.slane %v1267, 4
        %v1269 = vrot.slane %v231, 5
        %v1270 = vsel %vm1231, %v1268, %v1269
        %v1271 = vrot.slane %v1269, 4
        %v1272 = vrot.slane %v232, 5
        %v1273 = vsel %vm1231, %v1271, %v1272
        %v1274 = vrot.slane %v233, 5
        %v1275 = vrot.slane %v1274, 4
        %v1276 = vrot.slane %v234, 5
        %v1277 = vsel %vm1231, %v1275, %v1276
        %v1278 = vrot.slane %v1276, 4
        %v1279 = vrot.slane %v235, 5
        %v1280 = vsel %vm1231, %v1278, %v1279
        %v1281 = vrot.slane %v236, 5
        %v1282 = vrot.slane %v1281, 4
        %v1283 = vrot.slane %v237, 5
        %v1284 = vsel %vm1231, %v1282, %v1283
        %v1285 = vrot.slane %v1283, 4
        %v1286 = vrot.slane %v238, 5
        %v1287 = vsel %vm1231, %v1285, %v1286
        %v1288 = vrot.slane %v239, 5
        %v1289 = vrot.slane %v1288, 4
        %v1290 = vrot.slane %v240, 5
        %v1291 = vsel %vm1231, %v1289, %v1290
        %v1292 = vrot.slane %v1290, 4
        %v1293 = vrot.slane %v241, 5
        %v1294 = vsel %vm1231, %v1292, %v1293
        %v1295 = vrot.slane %v242, 5
        %v1296 = vrot.slane %v1295, 4
        %v1297 = vrot.slane %v243, 5
        %v1298 = vsel %vm1231, %v1296, %v1297
        %v1299 = vrot.slane %v1297, 4
        %v1300 = vrot.slane %v244, 5
        %v1301 = vsel %vm1231, %v1299, %v1300
        %v1302 = vrot.slane %v245, 5
        %v1303 = vrot.slane %v1302, 4
        %v1304 = vrot.slane %v246, 5
        %v1305 = vsel %vm1231, %v1303, %v1304
        %v1306 = vrot.slane %v1304, 4
        %v1307 = vrot.slane %v247, 5
        %v1308 = vsel %vm1231, %v1306, %v1307
        %v1309 = vrot.slane %v248, 5
        %v1310 = vrot.slane %v1309, 4
        %v1311 = vrot.slane %v249, 5
        %v1312 = vsel %vm1231, %v1310, %v1311
        %v1313 = vrot.slane %v1311, 4
        %v1314 = vrot.slane %v250, 5
        %v1315 = vsel %vm1231, %v1313, %v1314
        %v1316 = vrot.slane %v251, 5
        %v1317 = vrot.slane %v1316, 4
        %v1318 = vrot.slane %v252, 5
        %v1319 = vsel %vm1231, %v1317, %v1318
        %v1320 = vrot.slane %v1318, 4
        %v1321 = vrot.slane %v253, 5
        %v1322 = vsel %vm1231, %v1320, %v1321
        %v1323 = vrot.slane %v254, 5
        %v1324 = vrot.slane %v1323, 4
        %v1325 = vrot.slane %v255, 5
        %v1326 = vsel %vm1231, %v1324, %v1325
        %v1327 = vrot.slane %v1325, 4
        %v1328 = vrot.slane %v256, 5
        %v1329 = vsel %vm1231, %v1327, %v1328
        %v1330 = vrot.slane %v257, 5
        %v1331 = vrot.slane %v1330, 4
        %v1332 = vrot.slane %v258, 5
        %v1333 = vsel %vm1231, %v1331, %v1332
        %v1334 = vrot.slane %v1332, 4
        %v1335 = vrot.slane %v259, 5
        %v1336 = vsel %vm1231, %v1334, %v1335
        %v1337 = vrot.slane %v260, 5
        %v1338 = vrot.slane %v1337, 4
        %v1339 = vrot.slane %v261, 5
        %v1340 = vsel %vm1231, %v1338, %v1339
        %v1341 = vrot.slane %v1339, 4
        %v1342 = vrot.slane %v262, 5
        %v1343 = vsel %vm1231, %v1341, %v1342
        %s1344 = scalar_lea.vmem %s210, 4
        %v1345 = vld [vmem:[%s1344] sm:$0x3]
        %v1346 = vunpack.c.l.b16 %v1235
        %v1347 = vunpack.c.l.b16 %v1238
        %v1348 = vunpack.c.l.b16 %v1242
        %v1349 = vunpack.c.l.b16 %v1245
        %v1350 = vunpack.c.l.b16 %v1249
        %v1351 = vunpack.c.l.b16 %v1252
        %v1352 = vunpack.c.l.b16 %v1256
        %v1353 = vunpack.c.l.b16 %v1259
        %v1354 = vunpack.c.l.b16 %v1263
        %v1355 = vunpack.c.l.b16 %v1266
        %v1356 = vunpack.c.l.b16 %v1270
        %v1357 = vunpack.c.l.b16 %v1273
        %v1358 = vunpack.c.l.b16 %v1277
        %v1359 = vunpack.c.l.b16 %v1280
        %v1360 = vunpack.c.l.b16 %v1284
        %v1361 = vunpack.c.l.b16 %v1287
        %v1362 = vunpack.c.l.b16 %v1291
        %v1363 = vunpack.c.l.b16 %v1294
        %v1364 = vunpack.c.l.b16 %v1298
        %v1365 = vunpack.c.l.b16 %v1301
        %v1366 = vunpack.c.l.b16 %v1305
        %v1367 = vunpack.c.l.b16 %v1308
        %v1368 = vunpack.c.l.b16 %v1312
        %v1369 = vunpack.c.l.b16 %v1315
        %v1370 = vunpack.c.l.b16 %v1319
        %v1371 = vunpack.c.l.b16 %v1322
        %v1372 = vunpack.c.l.b16 %v1326
        %v1373 = vunpack.c.l.b16 %v1329
        %v1374 = vunpack.c.l.b16 %v1333
        %v1375 = vunpack.c.l.b16 %v1336
        %v1376 = vunpack.c.l.b16 %v1340
        %v1377 = vunpack.c.l.b16 %v1343
        %v1378 = vpack.c.b16 %v1347, %v1346
        %v1379 = vpack.c.b16 %v1349, %v1348
        %v1380 = vpack.c.b16 %v1351, %v1350
        %v1381 = vpack.c.b16 %v1353, %v1352
        %v1382 = vpack.c.b16 %v1355, %v1354
        %v1383 = vpack.c.b16 %v1357, %v1356
        %v1384 = vpack.c.b16 %v1359, %v1358
        %v1385 = vpack.c.b16 %v1361, %v1360
        %v1386 = vpack.c.b16 %v1363, %v1362
        %v1387 = vpack.c.b16 %v1365, %v1364
        %v1388 = vpack.c.b16 %v1367, %v1366
        %v1389 = vpack.c.b16 %v1369, %v1368
        %v1390 = vpack.c.b16 %v1371, %v1370
        %v1391 = vpack.c.b16 %v1373, %v1372
        %v1392 = vpack.c.b16 %v1375, %v1374
        %v1393 = vpack.c.b16 %v1377, %v1376
        %v1395 = vsel %vm707, %v1378, 0
        %v1398 = vsel %vm707, %v1379, 0
        %v1401 = vsel %vm707, %v1380, 0
        %v1404 = vsel %vm707, %v1381, 0
        %v1407 = vsel %vm707, %v1382, 0
        %v1410 = vsel %vm707, %v1383, 0
        %v1413 = vsel %vm707, %v1384, 0
        %v1416 = vsel %vm707, %v1385, 0
        %v1419 = vsel %vm707, %v1386, 0
        %v1422 = vsel %vm707, %v1387, 0
        %v1425 = vsel %vm707, %v1388, 0
        %v1428 = vsel %vm707, %v1389, 0
        %v1431 = vsel %vm707, %v1390, 0
        %v1434 = vsel %vm707, %v1391, 0
        %v1437 = vsel %vm707, %v1392, 0
        %v1440 = vsel %vm707, %v1393, 0
        %v1443 = vsel %vm756, %v1345, 0
        %1445 = vmatprep.subr.bf16.mxu0 0
        %1446 = vmatpush1.bf16.msra.mxu0 %v1443
        %1447 = vmatprep.subr.bf16.mxu0 0
        %1448 = vmatpush1.bf16.msra.mxu0 0
        %1449 = vmatprep.subr.bf16.mxu0 0
        %1450 = vmatpush1.bf16.msra.mxu0 0
        %1451 = vmatprep.subr.bf16.mxu0 0
        %1452 = vmatpush1.bf16.msra.mxu0 0
        %1453 = vmatprep.subr.bf16.mxu0 0
        %1454 = vmatpush1.bf16.msra.mxu0 0
        %1455 = vmatprep.subr.bf16.mxu0 0
        %1456 = vmatpush1.bf16.msra.mxu0 0
        %1457 = vmatprep.subr.bf16.mxu0 0
        %1458 = vmatpush1.bf16.msra.mxu0 0
        %1459 = vmatprep.subr.bf16.mxu0 0
        %1460 = vmatpush1.bf16.msra.mxu0 0
        %1461 = vmatprep.subr.bf16.mxu0 0
        %1462 = vmatpush1.bf16.msra.mxu0 0
        %1463 = vmatprep.subr.bf16.mxu0 0
        %1464 = vmatpush1.bf16.msra.mxu0 0
        %1465 = vmatprep.subr.bf16.mxu0 0
        %1466 = vmatpush1.bf16.msra.mxu0 0
        %1467 = vmatprep.subr.bf16.mxu0 0
        %1468 = vmatpush1.bf16.msra.mxu0 0
        %1469 = vmatprep.subr.bf16.mxu0 0
        %1470 = vmatpush1.bf16.msra.mxu0 0
        %1471 = vmatprep.subr.bf16.mxu0 0
        %1472 = vmatpush1.bf16.msra.mxu0 0
        %1473 = vmatprep.subr.bf16.mxu0 0
        %1474 = vmatpush1.bf16.msra.mxu0 0
        %1475 = vmatprep.subr.bf16.mxu0 0
        %1476 = vmatpush1.bf16.msra.mxu0 0
        %1477 = vmatprep.mubr.bf16.mxu0 0
        %1478 = vmatmul.mubr.bf16.gmra.mrb[0].mxu0 %v1395
        %v1479 = vpop.f32.mrb[0].mxu0
        %v1480 = vadd.f32 0.0, %v1479
        %v1481 = vpop.f32.mrb[0].mxu0
        %v1482 = vpop.f32.mrb[0].mxu0
        %v1483 = vadd.f32 0.0, %v1482
        %v1484 = vpop.f32.mrb[0].mxu0
        %1485 = vmatprep.mubr.bf16.mxu0 0
        %1486 = vmatmul.mubr.bf16.gmra.mrb[0].mxu0 %v1398
        %v1487 = vpop.f32.mrb[0].mxu0
        %v1488 = vadd.f32 0.0, %v1487
        %v1489 = vpop.f32.mrb[0].mxu0
        %v1490 = vpop.f32.mrb[0].mxu0
        %v1491 = vadd.f32 0.0, %v1490
        %v1492 = vpop.f32.mrb[0].mxu0
        %1493 = vmatprep.mubr.bf16.mxu0 0
        %1494 = vmatmul.mubr.bf16.gmra.mrb[0].mxu0 %v1401
        %v1495 = vpop.f32.mrb[0].mxu0
        %v1496 = vadd.f32 0.0, %v1495
        %v1497 = vpop.f32.mrb[0].mxu0
        %v1498 = vpop.f32.mrb[0].mxu0
        %v1499 = vadd.f32 0.0, %v1498
        %v1500 = vpop.f32.mrb[0].mxu0
        %1501 = vmatprep.mubr.bf16.mxu0 0
        %1502 = vmatmul.mubr.bf16.gmra.mrb[0].mxu0 %v1404
        %v1503 = vpop.f32.mrb[0].mxu0
        %v1504 = vadd.f32 0.0, %v1503
        %v1505 = vpop.f32.mrb[0].mxu0
        %v1506 = vpop.f32.mrb[0].mxu0
        %v1507 = vadd.f32 0.0, %v1506
        %v1508 = vpop.f32.mrb[0].mxu0
        %1509 = vmatprep.mubr.bf16.mxu0 0
        %1510 = vmatmul.mubr.bf16.gmra.mrb[0].mxu0 %v1407
        %v1511 = vpop.f32.mrb[0].mxu0
        %v1512 = vadd.f32 0.0, %v1511
        %v1513 = vpop.f32.mrb[0].mxu0
        %v1514 = vpop.f32.mrb[0].mxu0
        %v1515 = vadd.f32 0.0, %v1514
        %v1516 = vpop.f32.mrb[0].mxu0
        %1517 = vmatprep.mubr.bf16.mxu0 0
        %1518 = vmatmul.mubr.bf16.gmra.mrb[0].mxu0 %v1410
        %v1519 = vpop.f32.mrb[0].mxu0
        %v1520 = vadd.f32 0.0, %v1519
        %v1521 = vpop.f32.mrb[0].mxu0
        %v1522 = vpop.f32.mrb[0].mxu0
        %v1523 = vadd.f32 0.0, %v1522
        %v1524 = vpop.f32.mrb[0].mxu0
        %1525 = vmatprep.mubr.bf16.mxu0 0
        %1526 = vmatmul.mubr.bf16.gmra.mrb[0].mxu0 %v1413
        %v1527 = vpop.f32.mrb[0].mxu0
        %v1528 = vadd.f32 0.0, %v1527
        %v1529 = vpop.f32.mrb[0].mxu0
        %v1530 = vpop.f32.mrb[0].mxu0
        %v1531 = vadd.f32 0.0, %v1530
        %v1532 = vpop.f32.mrb[0].mxu0
        %1533 = vmatprep.mubr.bf16.mxu0 0
        %1534 = vmatmul.mubr.bf16.gmra.mrb[0].mxu0 %v1416
        %v1535 = vpop.f32.mrb[0].mxu0
        %v1536 = vadd.f32 0.0, %v1535
        %v1537 = vpop.f32.mrb[0].mxu0
        %v1538 = vpop.f32.mrb[0].mxu0
        %v1539 = vadd.f32 0.0, %v1538
        %v1540 = vpop.f32.mrb[0].mxu0
        %1541 = vmatprep.mubr.bf16.mxu0 0
        %1542 = vmatmul.mubr.bf16.gmra.mrb[0].mxu0 %v1419
        %v1543 = vpop.f32.mrb[0].mxu0
        %v1544 = vadd.f32 0.0, %v1543
        %v1545 = vpop.f32.mrb[0].mxu0
        %v1546 = vpop.f32.mrb[0].mxu0
        %v1547 = vadd.f32 0.0, %v1546
        %v1548 = vpop.f32.mrb[0].mxu0
        %1549 = vmatprep.mubr.bf16.mxu0 0
        %1550 = vmatmul.mubr.bf16.gmra.mrb[0].mxu0 %v1422
        %v1551 = vpop.f32.mrb[0].mxu0
        %v1552 = vadd.f32 0.0, %v1551
        %v1553 = vpop.f32.mrb[0].mxu0
        %v1554 = vpop.f32.mrb[0].mxu0
        %v1555 = vadd.f32 0.0, %v1554
        %v1556 = vpop.f32.mrb[0].mxu0
        %1557 = vmatprep.mubr.bf16.mxu0 0
        %1558 = vmatmul.mubr.bf16.gmra.mrb[0].mxu0 %v1425
        %v1559 = vpop.f32.mrb[0].mxu0
        %v1560 = vadd.f32 0.0, %v1559
        %v1561 = vpop.f32.mrb[0].mxu0
        %v1562 = vpop.f32.mrb[0].mxu0
        %v1563 = vadd.f32 0.0, %v1562
        %v1564 = vpop.f32.mrb[0].mxu0
        %1565 = vmatprep.mubr.bf16.mxu0 0
        %1566 = vmatmul.mubr.bf16.gmra.mrb[0].mxu0 %v1428
        %v1567 = vpop.f32.mrb[0].mxu0
        %v1568 = vadd.f32 0.0, %v1567
        %v1569 = vpop.f32.mrb[0].mxu0
        %v1570 = vpop.f32.mrb[0].mxu0
        %v1571 = vadd.f32 0.0, %v1570
        %v1572 = vpop.f32.mrb[0].mxu0
        %1573 = vmatprep.mubr.bf16.mxu0 0
        %1574 = vmatmul.mubr.bf16.gmra.mrb[0].mxu0 %v1431
        %v1575 = vpop.f32.mrb[0].mxu0
        %v1576 = vadd.f32 0.0, %v1575
        %v1577 = vpop.f32.mrb[0].mxu0
        %v1578 = vpop.f32.mrb[0].mxu0
        %v1579 = vadd.f32 0.0, %v1578
        %v1580 = vpop.f32.mrb[0].mxu0
        %1581 = vmatprep.mubr.bf16.mxu0 0
        %1582 = vmatmul.mubr.bf16.gmra.mrb[0].mxu0 %v1434
        %v1583 = vpop.f32.mrb[0].mxu0
        %v1584 = vadd.f32 0.0, %v1583
        %v1585 = vpop.f32.mrb[0].mxu0
        %v1586 = vpop.f32.mrb[0].mxu0
        %v1587 = vadd.f32 0.0, %v1586
        %v1588 = vpop.f32.mrb[0].mxu0
        %1589 = vmatprep.mubr.bf16.mxu0 0
        %1590 = vmatmul.mubr.bf16.gmra.mrb[0].mxu0 %v1437
        %v1591 = vpop.f32.mrb[0].mxu0
        %v1592 = vadd.f32 0.0, %v1591
        %v1593 = vpop.f32.mrb[0].mxu0
        %v1594 = vpop.f32.mrb[0].mxu0
        %v1595 = vadd.f32 0.0, %v1594
        %v1596 = vpop.f32.mrb[0].mxu0
        %1597 = vmatprep.mubr.bf16.mxu0 0
        %1598 = vmatmul.mubr.bf16.gmra.mrb[0].mxu0 %v1440
        %v1599 = vpop.f32.mrb[0].mxu0
        %v1600 = vadd.f32 0.0, %v1599
        %v1601 = vpop.f32.mrb[0].mxu0
        %v1602 = vpop.f32.mrb[0].mxu0
        %v1603 = vadd.f32 0.0, %v1602
        %v1604 = vpop.f32.mrb[0].mxu0
        %1605 = vdwg.mxu0
        %v1606 = vadd.f32 %v1087, %v1480
        %v1607 = vadd.f32 %v1090, %v1483
        %v1608 = vadd.f32 %v1095, %v1488
        %v1609 = vadd.f32 %v1098, %v1491
        %v1610 = vadd.f32 %v1103, %v1496
        %v1611 = vadd.f32 %v1106, %v1499
        %v1612 = vadd.f32 %v1111, %v1504
        %v1613 = vadd.f32 %v1114, %v1507
        %v1614 = vadd.f32 %v1119, %v1512
        %v1615 = vadd.f32 %v1122, %v1515
        %v1616 = vadd.f32 %v1127, %v1520
        %v1617 = vadd.f32 %v1130, %v1523
        %v1618 = vadd.f32 %v1135, %v1528
        %v1619 = vadd.f32 %v1138, %v1531
        %v1620 = vadd.f32 %v1143, %v1536
        %v1621 = vadd.f32 %v1146, %v1539
        %v1622 = vadd.f32 %v1151, %v1544
        %v1623 = vadd.f32 %v1154, %v1547
        %v1624 = vadd.f32 %v1159, %v1552
        %v1625 = vadd.f32 %v1162, %v1555
        %v1626 = vadd.f32 %v1167, %v1560
        %v1627 = vadd.f32 %v1170, %v1563
        %v1628 = vadd.f32 %v1175, %v1568
        %v1629 = vadd.f32 %v1178, %v1571
        %v1630 = vadd.f32 %v1183, %v1576
        %v1631 = vadd.f32 %v1186, %v1579
        %v1632 = vadd.f32 %v1191, %v1584
        %v1633 = vadd.f32 %v1194, %v1587
        %v1634 = vadd.f32 %v1199, %v1592
        %v1635 = vadd.f32 %v1202, %v1595
        %v1636 = vadd.f32 %v1207, %v1600
        %v1637 = vadd.f32 %v1210, %v1603
        %s1638 = scalar_lea.vmem %s210, 6
        %v1639 = vld [vmem:[%s1638] sm:$0x3]
        %v1642 = vunpack.c.l.b16 %v263
        %v1643 = vunpack.c.l.b16 %v264
        %v1644 = vpack.c.b16 %v1643, %v1642
        %v1646 = vsel %vm707, %v1644, 0
        %v1649 = vsel %vm756, %v1639, 0
        %1651 = vmatprep.subr.bf16.mxu0 0
        %1652 = vmatpush1.bf16.msra.mxu0 %v1649
        %1653 = vmatprep.subr.bf16.mxu0 0
        %1654 = vmatpush1.bf16.msra.mxu0 0
        %1655 = vmatprep.subr.bf16.mxu0 0
        %1656 = vmatpush1.bf16.msra.mxu0 0
        %1657 = vmatprep.subr.bf16.mxu0 0
        %1658 = vmatpush1.bf16.msra.mxu0 0
        %1659 = vmatprep.subr.bf16.mxu0 0
        %1660 = vmatpush1.bf16.msra.mxu0 0
        %1661 = vmatprep.subr.bf16.mxu0 0
        %1662 = vmatpush1.bf16.msra.mxu0 0
        %1663 = vmatprep.subr.bf16.mxu0 0
        %1664 = vmatpush1.bf16.msra.mxu0 0
        %1665 = vmatprep.subr.bf16.mxu0 0
        %1666 = vmatpush1.bf16.msra.mxu0 0
        %1667 = vmatprep.subr.bf16.mxu0 0
        %1668 = vmatpush1.bf16.msra.mxu0 0
        %1669 = vmatprep.subr.bf16.mxu0 0
        %1670 = vmatpush1.bf16.msra.mxu0 0
        %1671 = vmatprep.subr.bf16.mxu0 0
        %1672 = vmatpush1.bf16.msra.mxu0 0
        %1673 = vmatprep.subr.bf16.mxu0 0
        %1674 = vmatpush1.bf16.msra.mxu0 0
        %1675 = vmatprep.subr.bf16.mxu0 0
        %1676 = vmatpush1.bf16.msra.mxu0 0
        %1677 = vmatprep.subr.bf16.mxu0 0
        %1678 = vmatpush1.bf16.msra.mxu0 0
        %1679 = vmatprep.subr.bf16.mxu0 0
        %1680 = vmatpush1.bf16.msra.mxu0 0
        %1681 = vmatprep.subr.bf16.mxu0 0
        %1682 = vmatpush1.bf16.msra.mxu0 0
        %1683 = vmatprep.mubr.bf16.mxu0 0
        %1684 = vmatmul.mubr.bf16.gmra.mrb[0].mxu0 %v1005
        %v1685 = vpop.f32.mrb[0].mxu0
        %v1686 = vadd.f32 0.0, %v1685
        %v1687 = vpop.f32.mrb[0].mxu0
        %v1688 = vpop.f32.mrb[0].mxu0
        %v1689 = vadd.f32 0.0, %v1688
        %v1690 = vpop.f32.mrb[0].mxu0
        %1691 = vmatprep.mubr.bf16.mxu0 0
        %1692 = vmatmul.mubr.bf16.gmra.mrb[0].mxu0 %v1008
        %v1693 = vpop.f32.mrb[0].mxu0
        %v1694 = vadd.f32 0.0, %v1693
        %v1695 = vpop.f32.mrb[0].mxu0
        %v1696 = vpop.f32.mrb[0].mxu0
        %v1697 = vadd.f32 0.0, %v1696
        %v1698 = vpop.f32.mrb[0].mxu0
        %1699 = vmatprep.mubr.bf16.mxu0 0
        %1700 = vmatmul.mubr.bf16.gmra.mrb[0].mxu0 %v1011
        %v1701 = vpop.f32.mrb[0].mxu0
        %v1702 = vadd.f32 0.0, %v1701
        %v1703 = vpop.f32.mrb[0].mxu0
        %v1704 = vpop.f32.mrb[0].mxu0
        %v1705 = vadd.f32 0.0, %v1704
        %v1706 = vpop.f32.mrb[0].mxu0
        %1707 = vmatprep.mubr.bf16.mxu0 0
        %1708 = vmatmul.mubr.bf16.gmra.mrb[0].mxu0 %v1014
        %v1709 = vpop.f32.mrb[0].mxu0
        %v1710 = vadd.f32 0.0, %v1709
        %v1711 = vpop.f32.mrb[0].mxu0
        %v1712 = vpop.f32.mrb[0].mxu0
        %v1713 = vadd.f32 0.0, %v1712
        %v1714 = vpop.f32.mrb[0].mxu0
        %1715 = vmatprep.mubr.bf16.mxu0 0
        %1716 = vmatmul.mubr.bf16.gmra.mrb[0].mxu0 %v1017
        %v1717 = vpop.f32.mrb[0].mxu0
        %v1718 = vadd.f32 0.0, %v1717
        %v1719 = vpop.f32.mrb[0].mxu0
        %v1720 = vpop.f32.mrb[0].mxu0
        %v1721 = vadd.f32 0.0, %v1720
        %v1722 = vpop.f32.mrb[0].mxu0
        %1723 = vmatprep.mubr.bf16.mxu0 0
        %1724 = vmatmul.mubr.bf16.gmra.mrb[0].mxu0 %v1020
        %v1725 = vpop.f32.mrb[0].mxu0
        %v1726 = vadd.f32 0.0, %v1725
        %v1727 = vpop.f32.mrb[0].mxu0
        %v1728 = vpop.f32.mrb[0].mxu0
        %v1729 = vadd.f32 0.0, %v1728
        %v1730 = vpop.f32.mrb[0].mxu0
        %1731 = vmatprep.mubr.bf16.mxu0 0
        %1732 = vmatmul.mubr.bf16.gmra.mrb[0].mxu0 %v1023
        %v1733 = vpop.f32.mrb[0].mxu0
        %v1734 = vadd.f32 0.0, %v1733
        %v1735 = vpop.f32.mrb[0].mxu0
        %v1736 = vpop.f32.mrb[0].mxu0
        %v1737 = vadd.f32 0.0, %v1736
        %v1738 = vpop.f32.mrb[0].mxu0
        %1739 = vmatprep.mubr.bf16.mxu0 0
        %1740 = vmatmul.mubr.bf16.gmra.mrb[0].mxu0 %v1026
        %v1741 = vpop.f32.mrb[0].mxu0
        %v1742 = vadd.f32 0.0, %v1741
        %v1743 = vpop.f32.mrb[0].mxu0
        %v1744 = vpop.f32.mrb[0].mxu0
        %v1745 = vadd.f32 0.0, %v1744
        %v1746 = vpop.f32.mrb[0].mxu0
        %1747 = vmatprep.mubr.bf16.mxu0 0
        %1748 = vmatmul.mubr.bf16.gmra.mrb[0].mxu0 %v1029
        %v1749 = vpop.f32.mrb[0].mxu0
        %v1750 = vadd.f32 0.0, %v1749
        %v1751 = vpop.f32.mrb[0].mxu0
        %v1752 = vpop.f32.mrb[0].mxu0
        %v1753 = vadd.f32 0.0, %v1752
        %v1754 = vpop.f32.mrb[0].mxu0
        %1755 = vmatprep.mubr.bf16.mxu0 0
        %1756 = vmatmul.mubr.bf16.gmra.mrb[0].mxu0 %v1032
        %v1757 = vpop.f32.mrb[0].mxu0
        %v1758 = vadd.f32 0.0, %v1757
        %v1759 = vpop.f32.mrb[0].mxu0
        %v1760 = vpop.f32.mrb[0].mxu0
        %v1761 = vadd.f32 0.0, %v1760
        %v1762 = vpop.f32.mrb[0].mxu0
        %1763 = vmatprep.mubr.bf16.mxu0 0
        %1764 = vmatmul.mubr.bf16.gmra.mrb[0].mxu0 %v1035
        %v1765 = vpop.f32.mrb[0].mxu0
        %v1766 = vadd.f32 0.0, %v1765
        %v1767 = vpop.f32.mrb[0].mxu0
        %v1768 = vpop.f32.mrb[0].mxu0
        %v1769 = vadd.f32 0.0, %v1768
        %v1770 = vpop.f32.mrb[0].mxu0
        %1771 = vmatprep.mubr.bf16.mxu0 0
        %1772 = vmatmul.mubr.bf16.gmra.mrb[0].mxu0 %v1038
        %v1773 = vpop.f32.mrb[0].mxu0
        %v1774 = vadd.f32 0.0, %v1773
        %v1775 = vpop.f32.mrb[0].mxu0
        %v1776 = vpop.f32.mrb[0].mxu0
        %v1777 = vadd.f32 0.0, %v1776
        %v1778 = vpop.f32.mrb[0].mxu0
        %1779 = vmatprep.mubr.bf16.mxu0 0
        %1780 = vmatmul.mubr.bf16.gmra.mrb[0].mxu0 %v1041
        %v1781 = vpop.f32.mrb[0].mxu0
        %v1782 = vadd.f32 0.0, %v1781
        %v1783 = vpop.f32.mrb[0].mxu0
        %v1784 = vpop.f32.mrb[0].mxu0
        %v1785 = vadd.f32 0.0, %v1784
        %v1786 = vpop.f32.mrb[0].mxu0
        %1787 = vmatprep.mubr.bf16.mxu0 0
        %1788 = vmatmul.mubr.bf16.gmra.mrb[0].mxu0 %v1044
        %v1789 = vpop.f32.mrb[0].mxu0
        %v1790 = vadd.f32 0.0, %v1789
        %v1791 = vpop.f32.mrb[0].mxu0
        %v1792 = vpop.f32.mrb[0].mxu0
        %v1793 = vadd.f32 0.0, %v1792
        %v1794 = vpop.f32.mrb[0].mxu0
        %1795 = vmatprep.mubr.bf16.mxu0 0
        %1796 = vmatmul.mubr.bf16.gmra.mrb[0].mxu0 %v1047
        %v1797 = vpop.f32.mrb[0].mxu0
        %v1798 = vadd.f32 0.0, %v1797
        %v1799 = vpop.f32.mrb[0].mxu0
        %v1800 = vpop.f32.mrb[0].mxu0
        %v1801 = vadd.f32 0.0, %v1800
        %v1802 = vpop.f32.mrb[0].mxu0
        %1803 = vmatprep.mubr.bf16.mxu0 0
        %1804 = vmatmul.mubr.bf16.gmra.mrb[0].mxu0 %v1646
        %v1805 = vpop.f32.mrb[0].mxu0
        %v1806 = vadd.f32 0.0, %v1805
        %v1807 = vpop.f32.mrb[0].mxu0
        %v1808 = vpop.f32.mrb[0].mxu0
        %v1809 = vadd.f32 0.0, %v1808
        %v1810 = vpop.f32.mrb[0].mxu0
        %1811 = vdwg.mxu0
        %v1812 = vadd.f32 %v1606, %v1686
        %v1813 = vadd.f32 %v1607, %v1689
        %v1814 = vadd.f32 %v1608, %v1694
        %v1815 = vadd.f32 %v1609, %v1697
        %v1816 = vadd.f32 %v1610, %v1702
        %v1817 = vadd.f32 %v1611, %v1705
        %v1818 = vadd.f32 %v1612, %v1710
        %v1819 = vadd.f32 %v1613, %v1713
        %v1820 = vadd.f32 %v1614, %v1718
        %v1821 = vadd.f32 %v1615, %v1721
        %v1822 = vadd.f32 %v1616, %v1726
        %v1823 = vadd.f32 %v1617, %v1729
        %v1824 = vadd.f32 %v1618, %v1734
        %v1825 = vadd.f32 %v1619, %v1737
        %v1826 = vadd.f32 %v1620, %v1742
        %v1827 = vadd.f32 %v1621, %v1745
        %v1828 = vadd.f32 %v1622, %v1750
        %v1829 = vadd.f32 %v1623, %v1753
        %v1830 = vadd.f32 %v1624, %v1758
        %v1831 = vadd.f32 %v1625, %v1761
        %v1832 = vadd.f32 %v1626, %v1766
        %v1833 = vadd.f32 %v1627, %v1769
        %v1834 = vadd.f32 %v1628, %v1774
        %v1835 = vadd.f32 %v1629, %v1777
        %v1836 = vadd.f32 %v1630, %v1782
        %v1837 = vadd.f32 %v1631, %v1785
        %v1838 = vadd.f32 %v1632, %v1790
        %v1839 = vadd.f32 %v1633, %v1793
        %v1840 = vadd.f32 %v1634, %v1798
        %v1841 = vadd.f32 %v1635, %v1801
        %v1842 = vadd.f32 %v1636, %v1806
        %v1843 = vadd.f32 %v1637, %v1809
        %v1845 = vshrl.u32 %v263, 16
        %v1847 = vrot.slane %v1845, 4
        %v1848 = vshll.u32 %v263, 16
        %v1850 = vrot.slane %v1848, 5
        %v1851 = vor.u32 %v1847, %v1850
        %v1852 = vrot.slane %v1851, 4
        %v1854 = vshll.u32 %v264, 16
        %v1856 = vrot.slane %v1854, 5
        %v1857 = vsel %vm272, %v1852, %v1856
        %v1858 = vshrl.u32 %v264, 16
        %v1860 = vrot.slane %v1858, 4
        %v1861 = vor.u32 %v1860, %v1856
        %v1862 = vrot.slane %v1861, 4
        %v1864 = vshll.u32 %v265, 16
        %v1866 = vrot.slane %v1864, 5
        %v1867 = vsel %vm272, %v1862, %v1866
        %s1868 = scalar_lea.vmem %s210, 8
        %v1869 = vld [vmem:[%s1868] sm:$0x3]
        %v1870 = vunpack.c.l.b16 %v1857
        %v1871 = vunpack.c.l.b16 %v1867
        %v1872 = vpack.c.b16 %v1871, %v1870
        %v1874 = vsel %vm707, %v1872, 0
        %v1877 = vsel %vm756, %v1869, 0
        %1879 = vmatprep.subr.bf16.mxu0 0
        %1880 = vmatpush1.bf16.msra.mxu0 %v1877
        %1881 = vmatprep.subr.bf16.mxu0 0
        %1882 = vmatpush1.bf16.msra.mxu0 0
        %1883 = vmatprep.subr.bf16.mxu0 0
        %1884 = vmatpush1.bf16.msra.mxu0 0
        %1885 = vmatprep.subr.bf16.mxu0 0
        %1886 = vmatpush1.bf16.msra.mxu0 0
        %1887 = vmatprep.subr.bf16.mxu0 0
        %1888 = vmatpush1.bf16.msra.mxu0 0
        %1889 = vmatprep.subr.bf16.mxu0 0
        %1890 = vmatpush1.bf16.msra.mxu0 0
        %1891 = vmatprep.subr.bf16.mxu0 0
        %1892 = vmatpush1.bf16.msra.mxu0 0
        %1893 = vmatprep.subr.bf16.mxu0 0
        %1894 = vmatpush1.bf16.msra.mxu0 0
        %1895 = vmatprep.subr.bf16.mxu0 0
        %1896 = vmatpush1.bf16.msra.mxu0 0
        %1897 = vmatprep.subr.bf16.mxu0 0
        %1898 = vmatpush1.bf16.msra.mxu0 0
        %1899 = vmatprep.subr.bf16.mxu0 0
        %1900 = vmatpush1.bf16.msra.mxu0 0
        %1901 = vmatprep.subr.bf16.mxu0 0
        %1902 = vmatpush1.bf16.msra.mxu0 0
        %1903 = vmatprep.subr.bf16.mxu0 0
        %1904 = vmatpush1.bf16.msra.mxu0 0
        %1905 = vmatprep.subr.bf16.mxu0 0
        %1906 = vmatpush1.bf16.msra.mxu0 0
        %1907 = vmatprep.subr.bf16.mxu0 0
        %1908 = vmatpush1.bf16.msra.mxu0 0
        %1909 = vmatprep.subr.bf16.mxu0 0
        %1910 = vmatpush1.bf16.msra.mxu0 0
        %1911 = vmatprep.mubr.bf16.mxu0 0
        %1912 = vmatmul.mubr.bf16.gmra.mrb[0].mxu0 %v712
        %v1913 = vpop.f32.mrb[0].mxu0
        %v1914 = vadd.f32 0.0, %v1913
        %v1915 = vpop.f32.mrb[0].mxu0
        %v1916 = vpop.f32.mrb[0].mxu0
        %v1917 = vadd.f32 0.0, %v1916
        %v1918 = vpop.f32.mrb[0].mxu0
        %1919 = vmatprep.mubr.bf16.mxu0 0
        %1920 = vmatmul.mubr.bf16.gmra.mrb[0].mxu0 %v715
        %v1921 = vpop.f32.mrb[0].mxu0
        %v1922 = vadd.f32 0.0, %v1921
        %v1923 = vpop.f32.mrb[0].mxu0
        %v1924 = vpop.f32.mrb[0].mxu0
        %v1925 = vadd.f32 0.0, %v1924
        %v1926 = vpop.f32.mrb[0].mxu0
        %1927 = vmatprep.mubr.bf16.mxu0 0
        %1928 = vmatmul.mubr.bf16.gmra.mrb[0].mxu0 %v718
        %v1929 = vpop.f32.mrb[0].mxu0
        %v1930 = vadd.f32 0.0, %v1929
        %v1931 = vpop.f32.mrb[0].mxu0
        %v1932 = vpop.f32.mrb[0].mxu0
        %v1933 = vadd.f32 0.0, %v1932
        %v1934 = vpop.f32.mrb[0].mxu0
        %1935 = vmatprep.mubr.bf16.mxu0 0
        %1936 = vmatmul.mubr.bf16.gmra.mrb[0].mxu0 %v721
        %v1937 = vpop.f32.mrb[0].mxu0
        %v1938 = vadd.f32 0.0, %v1937
        %v1939 = vpop.f32.mrb[0].mxu0
        %v1940 = vpop.f32.mrb[0].mxu0
        %v1941 = vadd.f32 0.0, %v1940
        %v1942 = vpop.f32.mrb[0].mxu0
        %1943 = vmatprep.mubr.bf16.mxu0 0
        %1944 = vmatmul.mubr.bf16.gmra.mrb[0].mxu0 %v724
        %v1945 = vpop.f32.mrb[0].mxu0
        %v1946 = vadd.f32 0.0, %v1945
        %v1947 = vpop.f32.mrb[0].mxu0
        %v1948 = vpop.f32.mrb[0].mxu0
        %v1949 = vadd.f32 0.0, %v1948
        %v1950 = vpop.f32.mrb[0].mxu0
        %1951 = vmatprep.mubr.bf16.mxu0 0
        %1952 = vmatmul.mubr.bf16.gmra.mrb[0].mxu0 %v727
        %v1953 = vpop.f32.mrb[0].mxu0
        %v1954 = vadd.f32 0.0, %v1953
        %v1955 = vpop.f32.mrb[0].mxu0
        %v1956 = vpop.f32.mrb[0].mxu0
        %v1957 = vadd.f32 0.0, %v1956
        %v1958 = vpop.f32.mrb[0].mxu0
        %1959 = vmatprep.mubr.bf16.mxu0 0
        %1960 = vmatmul.mubr.bf16.gmra.mrb[0].mxu0 %v730
        %v1961 = vpop.f32.mrb[0].mxu0
        %v1962 = vadd.f32 0.0, %v1961
        %v1963 = vpop.f32.mrb[0].mxu0
        %v1964 = vpop.f32.mrb[0].mxu0
        %v1965 = vadd.f32 0.0, %v1964
        %v1966 = vpop.f32.mrb[0].mxu0
        %1967 = vmatprep.mubr.bf16.mxu0 0
        %1968 = vmatmul.mubr.bf16.gmra.mrb[0].mxu0 %v733
        %v1969 = vpop.f32.mrb[0].mxu0
        %v1970 = vadd.f32 0.0, %v1969
        %v1971 = vpop.f32.mrb[0].mxu0
        %v1972 = vpop.f32.mrb[0].mxu0
        %v1973 = vadd.f32 0.0, %v1972
        %v1974 = vpop.f32.mrb[0].mxu0
        %1975 = vmatprep.mubr.bf16.mxu0 0
        %1976 = vmatmul.mubr.bf16.gmra.mrb[0].mxu0 %v736
        %v1977 = vpop.f32.mrb[0].mxu0
        %v1978 = vadd.f32 0.0, %v1977
        %v1979 = vpop.f32.mrb[0].mxu0
        %v1980 = vpop.f32.mrb[0].mxu0
        %v1981 = vadd.f32 0.0, %v1980
        %v1982 = vpop.f32.mrb[0].mxu0
        %1983 = vmatprep.mubr.bf16.mxu0 0
        %1984 = vmatmul.mubr.bf16.gmra.mrb[0].mxu0 %v739
        %v1985 = vpop.f32.mrb[0].mxu0
        %v1986 = vadd.f32 0.0, %v1985
        %v1987 = vpop.f32.mrb[0].mxu0
        %v1988 = vpop.f32.mrb[0].mxu0
        %v1989 = vadd.f32 0.0, %v1988
        %v1990 = vpop.f32.mrb[0].mxu0
        %1991 = vmatprep.mubr.bf16.mxu0 0
        %1992 = vmatmul.mubr.bf16.gmra.mrb[0].mxu0 %v742
        %v1993 = vpop.f32.mrb[0].mxu0
        %v1994 = vadd.f32 0.0, %v1993
        %v1995 = vpop.f32.mrb[0].mxu0
        %v1996 = vpop.f32.mrb[0].mxu0
        %v1997 = vadd.f32 0.0, %v1996
        %v1998 = vpop.f32.mrb[0].mxu0
        %1999 = vmatprep.mubr.bf16.mxu0 0
        %2000 = vmatmul.mubr.bf16.gmra.mrb[0].mxu0 %v745
        %v2001 = vpop.f32.mrb[0].mxu0
        %v2002 = vadd.f32 0.0, %v2001
        %v2003 = vpop.f32.mrb[0].mxu0
        %v2004 = vpop.f32.mrb[0].mxu0
        %v2005 = vadd.f32 0.0, %v2004
        %v2006 = vpop.f32.mrb[0].mxu0
        %2007 = vmatprep.mubr.bf16.mxu0 0
        %2008 = vmatmul.mubr.bf16.gmra.mrb[0].mxu0 %v748
        %v2009 = vpop.f32.mrb[0].mxu0
        %v2010 = vadd.f32 0.0, %v2009
        %v2011 = vpop.f32.mrb[0].mxu0
        %v2012 = vpop.f32.mrb[0].mxu0
        %v2013 = vadd.f32 0.0, %v2012
        %v2014 = vpop.f32.mrb[0].mxu0
        %2015 = vmatprep.mubr.bf16.mxu0 0
        %2016 = vmatmul.mubr.bf16.gmra.mrb[0].mxu0 %v751
        %v2017 = vpop.f32.mrb[0].mxu0
        %v2018 = vadd.f32 0.0, %v2017
        %v2019 = vpop.f32.mrb[0].mxu0
        %v2020 = vpop.f32.mrb[0].mxu0
        %v2021 = vadd.f32 0.0, %v2020
        %v2022 = vpop.f32.mrb[0].mxu0
        %2023 = vmatprep.mubr.bf16.mxu0 0
        %2024 = vmatmul.mubr.bf16.gmra.mrb[0].mxu0 %v754
        %v2025 = vpop.f32.mrb[0].mxu0
        %v2026 = vadd.f32 0.0, %v2025
        %v2027 = vpop.f32.mrb[0].mxu0
        %v2028 = vpop.f32.mrb[0].mxu0
        %v2029 = vadd.f32 0.0, %v2028
        %v2030 = vpop.f32.mrb[0].mxu0
        %2031 = vmatprep.mubr.bf16.mxu0 0
        %2032 = vmatmul.mubr.bf16.gmra.mrb[0].mxu0 %v1874
        %v2033 = vpop.f32.mrb[0].mxu0
        %v2034 = vadd.f32 0.0, %v2033
        %v2035 = vpop.f32.mrb[0].mxu0
        %v2036 = vpop.f32.mrb[0].mxu0
        %v2037 = vadd.f32 0.0, %v2036
        %v2038 = vpop.f32.mrb[0].mxu0
        %2039 = vdwg.mxu0
        %v2040 = vadd.f32 %v1812, %v1914
        %v2041 = vadd.f32 %v1813, %v1917
        %v2042 = vadd.f32 %v1814, %v1922
        %v2043 = vadd.f32 %v1815, %v1925
        %v2044 = vadd.f32 %v1816, %v1930
        %v2045 = vadd.f32 %v1817, %v1933
        %v2046 = vadd.f32 %v1818, %v1938
        %v2047 = vadd.f32 %v1819, %v1941
        %v2048 = vadd.f32 %v1820, %v1946
        %v2049 = vadd.f32 %v1821, %v1949
        %v2050 = vadd.f32 %v1822, %v1954
        %v2051 = vadd.f32 %v1823, %v1957
        %v2052 = vadd.f32 %v1824, %v1962
        %v2053 = vadd.f32 %v1825, %v1965
        %v2054 = vadd.f32 %v1826, %v1970
        %v2055 = vadd.f32 %v1827, %v1973
        %v2056 = vadd.f32 %v1828, %v1978
        %v2057 = vadd.f32 %v1829, %v1981
        %v2058 = vadd.f32 %v1830, %v1986
        %v2059 = vadd.f32 %v1831, %v1989
        %v2060 = vadd.f32 %v1832, %v1994
        %v2061 = vadd.f32 %v1833, %v1997
        %v2062 = vadd.f32 %v1834, %v2002
        %v2063 = vadd.f32 %v1835, %v2005
        %v2064 = vadd.f32 %v1836, %v2010
        %v2065 = vadd.f32 %v1837, %v2013
        %v2066 = vadd.f32 %v1838, %v2018
        %v2067 = vadd.f32 %v1839, %v2021
        %v2068 = vadd.f32 %v1840, %v2026
        %v2069 = vadd.f32 %v1841, %v2029
        %v2070 = vadd.f32 %v1842, %v2034
        %v2071 = vadd.f32 %v1843, %v2037
        %v2073 = vrot.slane %v263, 5
        %v2074 = vrot.slane %v2073, 4
        %v2075 = vrot.slane %v264, 5
        %v2076 = vsel %vm1231, %v2074, %v2075
        %v2077 = vrot.slane %v2075, 4
        %v2078 = vrot.slane %v265, 5
        %v2079 = vsel %vm1231, %v2077, %v2078
        %s2080 = scalar_lea.vmem %s210, 10
        %v2081 = vld [vmem:[%s2080] sm:$0x3]
        %v2082 = vunpack.c.l.b16 %v2076
        %v2083 = vunpack.c.l.b16 %v2079
        %v2084 = vpack.c.b16 %v2083, %v2082
        %v2086 = vsel %vm707, %v2084, 0
        %v2089 = vsel %vm756, %v2081, 0
        %2091 = vmatprep.subr.bf16.mxu0 0
        %2092 = vmatpush1.bf16.msra.mxu0 %v2089
        %2093 = vmatprep.subr.bf16.mxu0 0
        %2094 = vmatpush1.bf16.msra.mxu0 0
        %2095 = vmatprep.subr.bf16.mxu0 0
        %2096 = vmatpush1.bf16.msra.mxu0 0
        %2097 = vmatprep.subr.bf16.mxu0 0
        %2098 = vmatpush1.bf16.msra.mxu0 0
        %2099 = vmatprep.subr.bf16.mxu0 0
        %2100 = vmatpush1.bf16.msra.mxu0 0
        %2101 = vmatprep.subr.bf16.mxu0 0
        %2102 = vmatpush1.bf16.msra.mxu0 0
        %2103 = vmatprep.subr.bf16.mxu0 0
        %2104 = vmatpush1.bf16.msra.mxu0 0
        %2105 = vmatprep.subr.bf16.mxu0 0
        %2106 = vmatpush1.bf16.msra.mxu0 0
        %2107 = vmatprep.subr.bf16.mxu0 0
        %2108 = vmatpush1.bf16.msra.mxu0 0
        %2109 = vmatprep.subr.bf16.mxu0 0
        %2110 = vmatpush1.bf16.msra.mxu0 0
        %2111 = vmatprep.subr.bf16.mxu0 0
        %2112 = vmatpush1.bf16.msra.mxu0 0
        %2113 = vmatprep.subr.bf16.mxu0 0
        %2114 = vmatpush1.bf16.msra.mxu0 0
        %2115 = vmatprep.subr.bf16.mxu0 0
        %2116 = vmatpush1.bf16.msra.mxu0 0
        %2117 = vmatprep.subr.bf16.mxu0 0
        %2118 = vmatpush1.bf16.msra.mxu0 0
        %2119 = vmatprep.subr.bf16.mxu0 0
        %2120 = vmatpush1.bf16.msra.mxu0 0
        %2121 = vmatprep.subr.bf16.mxu0 0
        %2122 = vmatpush1.bf16.msra.mxu0 0
        %2123 = vmatprep.mubr.bf16.mxu0 0
        %2124 = vmatmul.mubr.bf16.gmra.mrb[0].mxu0 %v1398
        %v2125 = vpop.f32.mrb[0].mxu0
        %v2126 = vadd.f32 0.0, %v2125
        %v2127 = vpop.f32.mrb[0].mxu0
        %v2128 = vpop.f32.mrb[0].mxu0
        %v2129 = vadd.f32 0.0, %v2128
        %v2130 = vpop.f32.mrb[0].mxu0
        %2131 = vmatprep.mubr.bf16.mxu0 0
        %2132 = vmatmul.mubr.bf16.gmra.mrb[0].mxu0 %v1401
        %v2133 = vpop.f32.mrb[0].mxu0
        %v2134 = vadd.f32 0.0, %v2133
        %v2135 = vpop.f32.mrb[0].mxu0
        %v2136 = vpop.f32.mrb[0].mxu0
        %v2137 = vadd.f32 0.0, %v2136
        %v2138 = vpop.f32.mrb[0].mxu0
        %2139 = vmatprep.mubr.bf16.mxu0 0
        %2140 = vmatmul.mubr.bf16.gmra.mrb[0].mxu0 %v1404
        %v2141 = vpop.f32.mrb[0].mxu0
        %v2142 = vadd.f32 0.0, %v2141
        %v2143 = vpop.f32.mrb[0].mxu0
        %v2144 = vpop.f32.mrb[0].mxu0
        %v2145 = vadd.f32 0.0, %v2144
        %v2146 = vpop.f32.mrb[0].mxu0
        %2147 = vmatprep.mubr.bf16.mxu0 0
        %2148 = vmatmul.mubr.bf16.gmra.mrb[0].mxu0 %v1407
        %v2149 = vpop.f32.mrb[0].mxu0
        %v2150 = vadd.f32 0.0, %v2149
        %v2151 = vpop.f32.mrb[0].mxu0
        %v2152 = vpop.f32.mrb[0].mxu0
        %v2153 = vadd.f32 0.0, %v2152
        %v2154 = vpop.f32.mrb[0].mxu0
        %2155 = vmatprep.mubr.bf16.mxu0 0
        %2156 = vmatmul.mubr.bf16.gmra.mrb[0].mxu0 %v1410
        %v2157 = vpop.f32.mrb[0].mxu0
        %v2158 = vadd.f32 0.0, %v2157
        %v2159 = vpop.f32.mrb[0].mxu0
        %v2160 = vpop.f32.mrb[0].mxu0
        %v2161 = vadd.f32 0.0, %v2160
        %v2162 = vpop.f32.mrb[0].mxu0
        %2163 = vmatprep.mubr.bf16.mxu0 0
        %2164 = vmatmul.mubr.bf16.gmra.mrb[0].mxu0 %v1413
        %v2165 = vpop.f32.mrb[0].mxu0
        %v2166 = vadd.f32 0.0, %v2165
        %v2167 = vpop.f32.mrb[0].mxu0
        %v2168 = vpop.f32.mrb[0].mxu0
        %v2169 = vadd.f32 0.0, %v2168
        %v2170 = vpop.f32.mrb[0].mxu0
        %2171 = vmatprep.mubr.bf16.mxu0 0
        %2172 = vmatmul.mubr.bf16.gmra.mrb[0].mxu0 %v1416
        %v2173 = vpop.f32.mrb[0].mxu0
        %v2174 = vadd.f32 0.0, %v2173
        %v2175 = vpop.f32.mrb[0].mxu0
        %v2176 = vpop.f32.mrb[0].mxu0
        %v2177 = vadd.f32 0.0, %v2176
        %v2178 = vpop.f32.mrb[0].mxu0
        %2179 = vmatprep.mubr.bf16.mxu0 0
        %2180 = vmatmul.mubr.bf16.gmra.mrb[0].mxu0 %v1419
        %v2181 = vpop.f32.mrb[0].mxu0
        %v2182 = vadd.f32 0.0, %v2181
        %v2183 = vpop.f32.mrb[0].mxu0
        %v2184 = vpop.f32.mrb[0].mxu0
        %v2185 = vadd.f32 0.0, %v2184
        %v2186 = vpop.f32.mrb[0].mxu0
        %2187 = vmatprep.mubr.bf16.mxu0 0
        %2188 = vmatmul.mubr.bf16.gmra.mrb[0].mxu0 %v1422
        %v2189 = vpop.f32.mrb[0].mxu0
        %v2190 = vadd.f32 0.0, %v2189
        %v2191 = vpop.f32.mrb[0].mxu0
        %v2192 = vpop.f32.mrb[0].mxu0
        %v2193 = vadd.f32 0.0, %v2192
        %v2194 = vpop.f32.mrb[0].mxu0
        %2195 = vmatprep.mubr.bf16.mxu0 0
        %2196 = vmatmul.mubr.bf16.gmra.mrb[0].mxu0 %v1425
        %v2197 = vpop.f32.mrb[0].mxu0
        %v2198 = vadd.f32 0.0, %v2197
        %v2199 = vpop.f32.mrb[0].mxu0
        %v2200 = vpop.f32.mrb[0].mxu0
        %v2201 = vadd.f32 0.0, %v2200
        %v2202 = vpop.f32.mrb[0].mxu0
        %2203 = vmatprep.mubr.bf16.mxu0 0
        %2204 = vmatmul.mubr.bf16.gmra.mrb[0].mxu0 %v1428
        %v2205 = vpop.f32.mrb[0].mxu0
        %v2206 = vadd.f32 0.0, %v2205
        %v2207 = vpop.f32.mrb[0].mxu0
        %v2208 = vpop.f32.mrb[0].mxu0
        %v2209 = vadd.f32 0.0, %v2208
        %v2210 = vpop.f32.mrb[0].mxu0
        %2211 = vmatprep.mubr.bf16.mxu0 0
        %2212 = vmatmul.mubr.bf16.gmra.mrb[0].mxu0 %v1431
        %v2213 = vpop.f32.mrb[0].mxu0
        %v2214 = vadd.f32 0.0, %v2213
        %v2215 = vpop.f32.mrb[0].mxu0
        %v2216 = vpop.f32.mrb[0].mxu0
        %v2217 = vadd.f32 0.0, %v2216
        %v2218 = vpop.f32.mrb[0].mxu0
        %2219 = vmatprep.mubr.bf16.mxu0 0
        %2220 = vmatmul.mubr.bf16.gmra.mrb[0].mxu0 %v1434
        %v2221 = vpop.f32.mrb[0].mxu0
        %v2222 = vadd.f32 0.0, %v2221
        %v2223 = vpop.f32.mrb[0].mxu0
        %v2224 = vpop.f32.mrb[0].mxu0
        %v2225 = vadd.f32 0.0, %v2224
        %v2226 = vpop.f32.mrb[0].mxu0
        %2227 = vmatprep.mubr.bf16.mxu0 0
        %2228 = vmatmul.mubr.bf16.gmra.mrb[0].mxu0 %v1437
        %v2229 = vpop.f32.mrb[0].mxu0
        %v2230 = vadd.f32 0.0, %v2229
        %v2231 = vpop.f32.mrb[0].mxu0
        %v2232 = vpop.f32.mrb[0].mxu0
        %v2233 = vadd.f32 0.0, %v2232
        %v2234 = vpop.f32.mrb[0].mxu0
        %2235 = vmatprep.mubr.bf16.mxu0 0
        %2236 = vmatmul.mubr.bf16.gmra.mrb[0].mxu0 %v1440
        %v2237 = vpop.f32.mrb[0].mxu0
        %v2238 = vadd.f32 0.0, %v2237
        %v2239 = vpop.f32.mrb[0].mxu0
        %v2240 = vpop.f32.mrb[0].mxu0
        %v2241 = vadd.f32 0.0, %v2240
        %v2242 = vpop.f32.mrb[0].mxu0
        %2243 = vmatprep.mubr.bf16.mxu0 0
        %2244 = vmatmul.mubr.bf16.gmra.mrb[0].mxu0 %v2086
        %v2245 = vpop.f32.mrb[0].mxu0
        %v2246 = vadd.f32 0.0, %v2245
        %v2247 = vpop.f32.mrb[0].mxu0
        %v2248 = vpop.f32.mrb[0].mxu0
        %v2249 = vadd.f32 0.0, %v2248
        %v2250 = vpop.f32.mrb[0].mxu0
        %2251 = vdwg.mxu0
        %v2252 = vadd.f32 %v2040, %v2126
        %v2253 = vadd.f32 %v2041, %v2129
        %v2254 = vadd.f32 %v2042, %v2134
        %v2255 = vadd.f32 %v2043, %v2137
        %v2256 = vadd.f32 %v2044, %v2142
        %v2257 = vadd.f32 %v2045, %v2145
        %v2258 = vadd.f32 %v2046, %v2150
        %v2259 = vadd.f32 %v2047, %v2153
        %v2260 = vadd.f32 %v2048, %v2158
        %v2261 = vadd.f32 %v2049, %v2161
        %v2262 = vadd.f32 %v2050, %v2166
        %v2263 = vadd.f32 %v2051, %v2169
        %v2264 = vadd.f32 %v2052, %v2174
        %v2265 = vadd.f32 %v2053, %v2177
        %v2266 = vadd.f32 %v2054, %v2182
        %v2267 = vadd.f32 %v2055, %v2185
        %v2268 = vadd.f32 %v2056, %v2190
        %v2269 = vadd.f32 %v2057, %v2193
        %v2270 = vadd.f32 %v2058, %v2198
        %v2271 = vadd.f32 %v2059, %v2201
        %v2272 = vadd.f32 %v2060, %v2206
        %v2273 = vadd.f32 %v2061, %v2209
        %v2274 = vadd.f32 %v2062, %v2214
        %v2275 = vadd.f32 %v2063, %v2217
        %v2276 = vadd.f32 %v2064, %v2222
        %v2277 = vadd.f32 %v2065, %v2225
        %v2278 = vadd.f32 %v2066, %v2230
        %v2279 = vadd.f32 %v2067, %v2233
        %v2280 = vadd.f32 %v2068, %v2238
        %v2281 = vadd.f32 %v2069, %v2241
        %v2282 = vadd.f32 %v2070, %v2246
        %v2283 = vadd.f32 %v2071, %v2249
        %s2284 = scalar_lea.vmem %s210, 12
        %v2285 = vld [vmem:[%s2284] sm:$0x3]
        %v2288 = vunpack.c.l.b16 %v266
        %v2289 = vunpack.c.l.b16 %v267
        %v2290 = vpack.c.b16 %v2289, %v2288
        %v2292 = vsel %vm707, %v2290, 0
        %v2295 = vsel %vm756, %v2285, 0
        %2297 = vmatprep.subr.bf16.mxu0 0
        %2298 = vmatpush1.bf16.msra.mxu0 %v2295
        %2299 = vmatprep.subr.bf16.mxu0 0
        %2300 = vmatpush1.bf16.msra.mxu0 0
        %2301 = vmatprep.subr.bf16.mxu0 0
        %2302 = vmatpush1.bf16.msra.mxu0 0
        %2303 = vmatprep.subr.bf16.mxu0 0
        %2304 = vmatpush1.bf16.msra.mxu0 0
        %2305 = vmatprep.subr.bf16.mxu0 0
        %2306 = vmatpush1.bf16.msra.mxu0 0
        %2307 = vmatprep.subr.bf16.mxu0 0
        %2308 = vmatpush1.bf16.msra.mxu0 0
        %2309 = vmatprep.subr.bf16.mxu0 0
        %2310 = vmatpush1.bf16.msra.mxu0 0
        %2311 = vmatprep.subr.bf16.mxu0 0
        %2312 = vmatpush1.bf16.msra.mxu0 0
        %2313 = vmatprep.subr.bf16.mxu0 0
        %2314 = vmatpush1.bf16.msra.mxu0 0
        %2315 = vmatprep.subr.bf16.mxu0 0
        %2316 = vmatpush1.bf16.msra.mxu0 0
        %2317 = vmatprep.subr.bf16.mxu0 0
        %2318 = vmatpush1.bf16.msra.mxu0 0
        %2319 = vmatprep.subr.bf16.mxu0 0
        %2320 = vmatpush1.bf16.msra.mxu0 0
        %2321 = vmatprep.subr.bf16.mxu0 0
        %2322 = vmatpush1.bf16.msra.mxu0 0
        %2323 = vmatprep.subr.bf16.mxu0 0
        %2324 = vmatpush1.bf16.msra.mxu0 0
        %2325 = vmatprep.subr.bf16.mxu0 0
        %2326 = vmatpush1.bf16.msra.mxu0 0
        %2327 = vmatprep.subr.bf16.mxu0 0
        %2328 = vmatpush1.bf16.msra.mxu0 0
        %2329 = vmatprep.mubr.bf16.mxu0 0
        %2330 = vmatmul.mubr.bf16.gmra.mrb[0].mxu0 %v1008
        %v2331 = vpop.f32.mrb[0].mxu0
        %v2332 = vadd.f32 0.0, %v2331
        %v2333 = vpop.f32.mrb[0].mxu0
        %v2334 = vpop.f32.mrb[0].mxu0
        %v2335 = vadd.f32 0.0, %v2334
        %v2336 = vpop.f32.mrb[0].mxu0
        %2337 = vmatprep.mubr.bf16.mxu0 0
        %2338 = vmatmul.mubr.bf16.gmra.mrb[0].mxu0 %v1011
        %v2339 = vpop.f32.mrb[0].mxu0
        %v2340 = vadd.f32 0.0, %v2339
        %v2341 = vpop.f32.mrb[0].mxu0
        %v2342 = vpop.f32.mrb[0].mxu0
        %v2343 = vadd.f32 0.0, %v2342
        %v2344 = vpop.f32.mrb[0].mxu0
        %2345 = vmatprep.mubr.bf16.mxu0 0
        %2346 = vmatmul.mubr.bf16.gmra.mrb[0].mxu0 %v1014
        %v2347 = vpop.f32.mrb[0].mxu0
        %v2348 = vadd.f32 0.0, %v2347
        %v2349 = vpop.f32.mrb[0].mxu0
        %v2350 = vpop.f32.mrb[0].mxu0
        %v2351 = vadd.f32 0.0, %v2350
        %v2352 = vpop.f32.mrb[0].mxu0
        %2353 = vmatprep.mubr.bf16.mxu0 0
        %2354 = vmatmul.mubr.bf16.gmra.mrb[0].mxu0 %v1017
        %v2355 = vpop.f32.mrb[0].mxu0
        %v2356 = vadd.f32 0.0, %v2355
        %v2357 = vpop.f32.mrb[0].mxu0
        %v2358 = vpop.f32.mrb[0].mxu0
        %v2359 = vadd.f32 0.0, %v2358
        %v2360 = vpop.f32.mrb[0].mxu0
        %2361 = vmatprep.mubr.bf16.mxu0 0
        %2362 = vmatmul.mubr.bf16.gmra.mrb[0].mxu0 %v1020
        %v2363 = vpop.f32.mrb[0].mxu0
        %v2364 = vadd.f32 0.0, %v2363
        %v2365 = vpop.f32.mrb[0].mxu0
        %v2366 = vpop.f32.mrb[0].mxu0
        %v2367 = vadd.f32 0.0, %v2366
        %v2368 = vpop.f32.mrb[0].mxu0
        %2369 = vmatprep.mubr.bf16.mxu0 0
        %2370 = vmatmul.mubr.bf16.gmra.mrb[0].mxu0 %v1023
        %v2371 = vpop.f32.mrb[0].mxu0
        %v2372 = vadd.f32 0.0, %v2371
        %v2373 = vpop.f32.mrb[0].mxu0
        %v2374 = vpop.f32.mrb[0].mxu0
        %v2375 = vadd.f32 0.0, %v2374
        %v2376 = vpop.f32.mrb[0].mxu0
        %2377 = vmatprep.mubr.bf16.mxu0 0
        %2378 = vmatmul.mubr.bf16.gmra.mrb[0].mxu0 %v1026
        %v2379 = vpop.f32.mrb[0].mxu0
        %v2380 = vadd.f32 0.0, %v2379
        %v2381 = vpop.f32.mrb[0].mxu0
        %v2382 = vpop.f32.mrb[0].mxu0
        %v2383 = vadd.f32 0.0, %v2382
        %v2384 = vpop.f32.mrb[0].mxu0
        %2385 = vmatprep.mubr.bf16.mxu0 0
        %2386 = vmatmul.mubr.bf16.gmra.mrb[0].mxu0 %v1029
        %v2387 = vpop.f32.mrb[0].mxu0
        %v2388 = vadd.f32 0.0, %v2387
        %v2389 = vpop.f32.mrb[0].mxu0
        %v2390 = vpop.f32.mrb[0].mxu0
        %v2391 = vadd.f32 0.0, %v2390
        %v2392 = vpop.f32.mrb[0].mxu0
        %2393 = vmatprep.mubr.bf16.mxu0 0
        %2394 = vmatmul.mubr.bf16.gmra.mrb[0].mxu0 %v1032
        %v2395 = vpop.f32.mrb[0].mxu0
        %v2396 = vadd.f32 0.0, %v2395
        %v2397 = vpop.f32.mrb[0].mxu0
        %v2398 = vpop.f32.mrb[0].mxu0
        %v2399 = vadd.f32 0.0, %v2398
        %v2400 = vpop.f32.mrb[0].mxu0
        %2401 = vmatprep.mubr.bf16.mxu0 0
        %2402 = vmatmul.mubr.bf16.gmra.mrb[0].mxu0 %v1035
        %v2403 = vpop.f32.mrb[0].mxu0
        %v2404 = vadd.f32 0.0, %v2403
        %v2405 = vpop.f32.mrb[0].mxu0
        %v2406 = vpop.f32.mrb[0].mxu0
        %v2407 = vadd.f32 0.0, %v2406
        %v2408 = vpop.f32.mrb[0].mxu0
        %2409 = vmatprep.mubr.bf16.mxu0 0
        %2410 = vmatmul.mubr.bf16.gmra.mrb[0].mxu0 %v1038
        %v2411 = vpop.f32.mrb[0].mxu0
        %v2412 = vadd.f32 0.0, %v2411
        %v2413 = vpop.f32.mrb[0].mxu0
        %v2414 = vpop.f32.mrb[0].mxu0
        %v2415 = vadd.f32 0.0, %v2414
        %v2416 = vpop.f32.mrb[0].mxu0
        %2417 = vmatprep.mubr.bf16.mxu0 0
        %2418 = vmatmul.mubr.bf16.gmra.mrb[0].mxu0 %v1041
        %v2419 = vpop.f32.mrb[0].mxu0
        %v2420 = vadd.f32 0.0, %v2419
        %v2421 = vpop.f32.mrb[0].mxu0
        %v2422 = vpop.f32.mrb[0].mxu0
        %v2423 = vadd.f32 0.0, %v2422
        %v2424 = vpop.f32.mrb[0].mxu0
        %2425 = vmatprep.mubr.bf16.mxu0 0
        %2426 = vmatmul.mubr.bf16.gmra.mrb[0].mxu0 %v1044
        %v2427 = vpop.f32.mrb[0].mxu0
        %v2428 = vadd.f32 0.0, %v2427
        %v2429 = vpop.f32.mrb[0].mxu0
        %v2430 = vpop.f32.mrb[0].mxu0
        %v2431 = vadd.f32 0.0, %v2430
        %v2432 = vpop.f32.mrb[0].mxu0
        %2433 = vmatprep.mubr.bf16.mxu0 0
        %2434 = vmatmul.mubr.bf16.gmra.mrb[0].mxu0 %v1047
        %v2435 = vpop.f32.mrb[0].mxu0
        %v2436 = vadd.f32 0.0, %v2435
        %v2437 = vpop.f32.mrb[0].mxu0
        %v2438 = vpop.f32.mrb[0].mxu0
        %v2439 = vadd.f32 0.0, %v2438
        %v2440 = vpop.f32.mrb[0].mxu0
        %2441 = vmatprep.mubr.bf16.mxu0 0
        %2442 = vmatmul.mubr.bf16.gmra.mrb[0].mxu0 %v1646
        %v2443 = vpop.f32.mrb[0].mxu0
        %v2444 = vadd.f32 0.0, %v2443
        %v2445 = vpop.f32.mrb[0].mxu0
        %v2446 = vpop.f32.mrb[0].mxu0
        %v2447 = vadd.f32 0.0, %v2446
        %v2448 = vpop.f32.mrb[0].mxu0
        %2449 = vmatprep.mubr.bf16.mxu0 0
        %2450 = vmatmul.mubr.bf16.gmra.mrb[0].mxu0 %v2292
        %v2451 = vpop.f32.mrb[0].mxu0
        %v2452 = vadd.f32 0.0, %v2451
        %v2453 = vpop.f32.mrb[0].mxu0
        %v2454 = vpop.f32.mrb[0].mxu0
        %v2455 = vadd.f32 0.0, %v2454
        %v2456 = vpop.f32.mrb[0].mxu0
        %2457 = vdwg.mxu0
        %v2458 = vadd.f32 %v2252, %v2332
        %v2459 = vadd.f32 %v2253, %v2335
        %v2460 = vadd.f32 %v2254, %v2340
        %v2461 = vadd.f32 %v2255, %v2343
        %v2462 = vadd.f32 %v2256, %v2348
        %v2463 = vadd.f32 %v2257, %v2351
        %v2464 = vadd.f32 %v2258, %v2356
        %v2465 = vadd.f32 %v2259, %v2359
        %v2466 = vadd.f32 %v2260, %v2364
        %v2467 = vadd.f32 %v2261, %v2367
        %v2468 = vadd.f32 %v2262, %v2372
        %v2469 = vadd.f32 %v2263, %v2375
        %v2470 = vadd.f32 %v2264, %v2380
        %v2471 = vadd.f32 %v2265, %v2383
        %v2472 = vadd.f32 %v2266, %v2388
        %v2473 = vadd.f32 %v2267, %v2391
        %v2474 = vadd.f32 %v2268, %v2396
        %v2475 = vadd.f32 %v2269, %v2399
        %v2476 = vadd.f32 %v2270, %v2404
        %v2477 = vadd.f32 %v2271, %v2407
        %v2478 = vadd.f32 %v2272, %v2412
        %v2479 = vadd.f32 %v2273, %v2415
        %v2480 = vadd.f32 %v2274, %v2420
        %v2481 = vadd.f32 %v2275, %v2423
        %v2482 = vadd.f32 %v2276, %v2428
        %v2483 = vadd.f32 %v2277, %v2431
        %v2484 = vadd.f32 %v2278, %v2436
        %v2485 = vadd.f32 %v2279, %v2439
        %v2486 = vadd.f32 %v2280, %v2444
        %v2487 = vadd.f32 %v2281, %v2447
        %v2488 = vadd.f32 %v2282, %v2452
        %v2489 = vadd.f32 %v2283, %v2455
        %v2491 = vshrl.u32 %v266, 16
        %v2493 = vrot.slane %v2491, 4
        %v2494 = vshll.u32 %v266, 16
        %v2496 = vrot.slane %v2494, 5
        %v2497 = vor.u32 %v2493, %v2496
        %v2498 = vrot.slane %v2497, 4
        %v2500 = vshll.u32 %v267, 16
        %v2502 = vrot.slane %v2500, 5
        %v2503 = vsel %vm272, %v2498, %v2502
        %v2504 = vshrl.u32 %v267, 16
        %v2506 = vrot.slane %v2504, 4
        %v2507 = vor.u32 %v2506, %v2502
        %v2508 = vrot.slane %v2507, 4
        %v2510 = vshll.u32 %v268, 16
        %v2512 = vrot.slane %v2510, 5
        %v2513 = vsel %vm272, %v2508, %v2512
        %s2514 = scalar_lea.vmem %s210, 14
        %v2515 = vld [vmem:[%s2514] sm:$0x3]
        %v2516 = vunpack.c.l.b16 %v2503
        %v2517 = vunpack.c.l.b16 %v2513
        %v2518 = vpack.c.b16 %v2517, %v2516
        %v2520 = vsel %vm707, %v2518, 0
        %v2523 = vsel %vm756, %v2515, 0
        %2525 = vmatprep.subr.bf16.mxu0 0
        %2526 = vmatpush1.bf16.msra.mxu0 %v2523
        %2527 = vmatprep.subr.bf16.mxu0 0
        %2528 = vmatpush1.bf16.msra.mxu0 0
        %2529 = vmatprep.subr.bf16.mxu0 0
        %2530 = vmatpush1.bf16.msra.mxu0 0
        %2531 = vmatprep.subr.bf16.mxu0 0
        %2532 = vmatpush1.bf16.msra.mxu0 0
        %2533 = vmatprep.subr.bf16.mxu0 0
        %2534 = vmatpush1.bf16.msra.mxu0 0
        %2535 = vmatprep.subr.bf16.mxu0 0
        %2536 = vmatpush1.bf16.msra.mxu0 0
        %2537 = vmatprep.subr.bf16.mxu0 0
        %2538 = vmatpush1.bf16.msra.mxu0 0
        %2539 = vmatprep.subr.bf16.mxu0 0
        %2540 = vmatpush1.bf16.msra.mxu0 0
        %2541 = vmatprep.subr.bf16.mxu0 0
        %2542 = vmatpush1.bf16.msra.mxu0 0
        %2543 = vmatprep.subr.bf16.mxu0 0
        %2544 = vmatpush1.bf16.msra.mxu0 0
        %2545 = vmatprep.subr.bf16.mxu0 0
        %2546 = vmatpush1.bf16.msra.mxu0 0
        %2547 = vmatprep.subr.bf16.mxu0 0
        %2548 = vmatpush1.bf16.msra.mxu0 0
        %2549 = vmatprep.subr.bf16.mxu0 0
        %2550 = vmatpush1.bf16.msra.mxu0 0
        %2551 = vmatprep.subr.bf16.mxu0 0
        %2552 = vmatpush1.bf16.msra.mxu0 0
        %2553 = vmatprep.subr.bf16.mxu0 0
        %2554 = vmatpush1.bf16.msra.mxu0 0
        %2555 = vmatprep.subr.bf16.mxu0 0
        %2556 = vmatpush1.bf16.msra.mxu0 0
        %2557 = vmatprep.mubr.bf16.mxu0 0
        %2558 = vmatmul.mubr.bf16.gmra.mrb[0].mxu0 %v715
        %v2559 = vpop.f32.mrb[0].mxu0
        %v2560 = vadd.f32 0.0, %v2559
        %v2561 = vpop.f32.mrb[0].mxu0
        %v2562 = vpop.f32.mrb[0].mxu0
        %v2563 = vadd.f32 0.0, %v2562
        %v2564 = vpop.f32.mrb[0].mxu0
        %2565 = vmatprep.mubr.bf16.mxu0 0
        %2566 = vmatmul.mubr.bf16.gmra.mrb[0].mxu0 %v718
        %v2567 = vpop.f32.mrb[0].mxu0
        %v2568 = vadd.f32 0.0, %v2567
        %v2569 = vpop.f32.mrb[0].mxu0
        %v2570 = vpop.f32.mrb[0].mxu0
        %v2571 = vadd.f32 0.0, %v2570
        %v2572 = vpop.f32.mrb[0].mxu0
        %2573 = vmatprep.mubr.bf16.mxu0 0
        %2574 = vmatmul.mubr.bf16.gmra.mrb[0].mxu0 %v721
        %v2575 = vpop.f32.mrb[0].mxu0
        %v2576 = vadd.f32 0.0, %v2575
        %v2577 = vpop.f32.mrb[0].mxu0
        %v2578 = vpop.f32.mrb[0].mxu0
        %v2579 = vadd.f32 0.0, %v2578
        %v2580 = vpop.f32.mrb[0].mxu0
        %2581 = vmatprep.mubr.bf16.mxu0 0
        %2582 = vmatmul.mubr.bf16.gmra.mrb[0].mxu0 %v724
        %v2583 = vpop.f32.mrb[0].mxu0
        %v2584 = vadd.f32 0.0, %v2583
        %v2585 = vpop.f32.mrb[0].mxu0
        %v2586 = vpop.f32.mrb[0].mxu0
        %v2587 = vadd.f32 0.0, %v2586
        %v2588 = vpop.f32.mrb[0].mxu0
        %2589 = vmatprep.mubr.bf16.mxu0 0
        %2590 = vmatmul.mubr.bf16.gmra.mrb[0].mxu0 %v727
        %v2591 = vpop.f32.mrb[0].mxu0
        %v2592 = vadd.f32 0.0, %v2591
        %v2593 = vpop.f32.mrb[0].mxu0
        %v2594 = vpop.f32.mrb[0].mxu0
        %v2595 = vadd.f32 0.0, %v2594
        %v2596 = vpop.f32.mrb[0].mxu0
        %2597 = vmatprep.mubr.bf16.mxu0 0
        %2598 = vmatmul.mubr.bf16.gmra.mrb[0].mxu0 %v730
        %v2599 = vpop.f32.mrb[0].mxu0
        %v2600 = vadd.f32 0.0, %v2599
        %v2601 = vpop.f32.mrb[0].mxu0
        %v2602 = vpop.f32.mrb[0].mxu0
        %v2603 = vadd.f32 0.0, %v2602
        %v2604 = vpop.f32.mrb[0].mxu0
        %2605 = vmatprep.mubr.bf16.mxu0 0
        %2606 = vmatmul.mubr.bf16.gmra.mrb[0].mxu0 %v733
        %v2607 = vpop.f32.mrb[0].mxu0
        %v2608 = vadd.f32 0.0, %v2607
        %v2609 = vpop.f32.mrb[0].mxu0
        %v2610 = vpop.f32.mrb[0].mxu0
        %v2611 = vadd.f32 0.0, %v2610
        %v2612 = vpop.f32.mrb[0].mxu0
        %2613 = vmatprep.mubr.bf16.mxu0 0
        %2614 = vmatmul.mubr.bf16.gmra.mrb[0].mxu0 %v736
        %v2615 = vpop.f32.mrb[0].mxu0
        %v2616 = vadd.f32 0.0, %v2615
        %v2617 = vpop.f32.mrb[0].mxu0
        %v2618 = vpop.f32.mrb[0].mxu0
        %v2619 = vadd.f32 0.0, %v2618
        %v2620 = vpop.f32.mrb[0].mxu0
        %2621 = vmatprep.mubr.bf16.mxu0 0
        %2622 = vmatmul.mubr.bf16.gmra.mrb[0].mxu0 %v739
        %v2623 = vpop.f32.mrb[0].mxu0
        %v2624 = vadd.f32 0.0, %v2623
        %v2625 = vpop.f32.mrb[0].mxu0
        %v2626 = vpop.f32.mrb[0].mxu0
        %v2627 = vadd.f32 0.0, %v2626
        %v2628 = vpop.f32.mrb[0].mxu0
        %2629 = vmatprep.mubr.bf16.mxu0 0
        %2630 = vmatmul.mubr.bf16.gmra.mrb[0].mxu0 %v742
        %v2631 = vpop.f32.mrb[0].mxu0
        %v2632 = vadd.f32 0.0, %v2631
        %v2633 = vpop.f32.mrb[0].mxu0
        %v2634 = vpop.f32.mrb[0].mxu0
        %v2635 = vadd.f32 0.0, %v2634
        %v2636 = vpop.f32.mrb[0].mxu0
        %2637 = vmatprep.mubr.bf16.mxu0 0
        %2638 = vmatmul.mubr.bf16.gmra.mrb[0].mxu0 %v745
        %v2639 = vpop.f32.mrb[0].mxu0
        %v2640 = vadd.f32 0.0, %v2639
        %v2641 = vpop.f32.mrb[0].mxu0
        %v2642 = vpop.f32.mrb[0].mxu0
        %v2643 = vadd.f32 0.0, %v2642
        %v2644 = vpop.f32.mrb[0].mxu0
        %2645 = vmatprep.mubr.bf16.mxu0 0
        %2646 = vmatmul.mubr.bf16.gmra.mrb[0].mxu0 %v748
        %v2647 = vpop.f32.mrb[0].mxu0
        %v2648 = vadd.f32 0.0, %v2647
        %v2649 = vpop.f32.mrb[0].mxu0
        %v2650 = vpop.f32.mrb[0].mxu0
        %v2651 = vadd.f32 0.0, %v2650
        %v2652 = vpop.f32.mrb[0].mxu0
        %2653 = vmatprep.mubr.bf16.mxu0 0
        %2654 = vmatmul.mubr.bf16.gmra.mrb[0].mxu0 %v751
        %v2655 = vpop.f32.mrb[0].mxu0
        %v2656 = vadd.f32 0.0, %v2655
        %v2657 = vpop.f32.mrb[0].mxu0
        %v2658 = vpop.f32.mrb[0].mxu0
        %v2659 = vadd.f32 0.0, %v2658
        %v2660 = vpop.f32.mrb[0].mxu0
        %2661 = vmatprep.mubr.bf16.mxu0 0
        %2662 = vmatmul.mubr.bf16.gmra.mrb[0].mxu0 %v754
        %v2663 = vpop.f32.mrb[0].mxu0
        %v2664 = vadd.f32 0.0, %v2663
        %v2665 = vpop.f32.mrb[0].mxu0
        %v2666 = vpop.f32.mrb[0].mxu0
        %v2667 = vadd.f32 0.0, %v2666
        %v2668 = vpop.f32.mrb[0].mxu0
        %2669 = vmatprep.mubr.bf16.mxu0 0
        %2670 = vmatmul.mubr.bf16.gmra.mrb[0].mxu0 %v1874
        %v2671 = vpop.f32.mrb[0].mxu0
        %v2672 = vadd.f32 0.0, %v2671
        %v2673 = vpop.f32.mrb[0].mxu0
        %v2674 = vpop.f32.mrb[0].mxu0
        %v2675 = vadd.f32 0.0, %v2674
        %v2676 = vpop.f32.mrb[0].mxu0
        %2677 = vmatprep.mubr.bf16.mxu0 0
        %2678 = vmatmul.mubr.bf16.gmra.mrb[0].mxu0 %v2520
        %v2679 = vpop.f32.mrb[0].mxu0
        %v2680 = vadd.f32 0.0, %v2679
        %v2681 = vpop.f32.mrb[0].mxu0
        %v2682 = vpop.f32.mrb[0].mxu0
        %v2683 = vadd.f32 0.0, %v2682
        %v2684 = vpop.f32.mrb[0].mxu0
        %2685 = vdwg.mxu0
        %v2686 = vadd.f32 %v2458, %v2560
        %v2687 = vadd.f32 %v2459, %v2563
        %v2688 = vadd.f32 %v2460, %v2568
        %v2689 = vadd.f32 %v2461, %v2571
        %v2690 = vadd.f32 %v2462, %v2576
        %v2691 = vadd.f32 %v2463, %v2579
        %v2692 = vadd.f32 %v2464, %v2584
        %v2693 = vadd.f32 %v2465, %v2587
        %v2694 = vadd.f32 %v2466, %v2592
        %v2695 = vadd.f32 %v2467, %v2595
        %v2696 = vadd.f32 %v2468, %v2600
        %v2697 = vadd.f32 %v2469, %v2603
        %v2698 = vadd.f32 %v2470, %v2608
        %v2699 = vadd.f32 %v2471, %v2611
        %v2700 = vadd.f32 %v2472, %v2616
        %v2701 = vadd.f32 %v2473, %v2619
        %v2702 = vadd.f32 %v2474, %v2624
        %v2703 = vadd.f32 %v2475, %v2627
        %v2704 = vadd.f32 %v2476, %v2632
        %v2705 = vadd.f32 %v2477, %v2635
        %v2706 = vadd.f32 %v2478, %v2640
        %v2707 = vadd.f32 %v2479, %v2643
        %v2708 = vadd.f32 %v2480, %v2648
        %v2709 = vadd.f32 %v2481, %v2651
        %v2710 = vadd.f32 %v2482, %v2656
        %v2711 = vadd.f32 %v2483, %v2659
        %v2712 = vadd.f32 %v2484, %v2664
        %v2713 = vadd.f32 %v2485, %v2667
        %v2714 = vadd.f32 %v2486, %v2672
        %v2715 = vadd.f32 %v2487, %v2675
        %v2716 = vadd.f32 %v2488, %v2680
        %v2717 = vadd.f32 %v2489, %v2683
        %v2719 = vrot.slane %v266, 5
        %v2720 = vrot.slane %v2719, 4
        %v2721 = vrot.slane %v267, 5
        %v2722 = vsel %vm1231, %v2720, %v2721
        %v2723 = vrot.slane %v2721, 4
        %v2724 = vrot.slane %v268, 5
        %v2725 = vsel %vm1231, %v2723, %v2724
        %s2726 = scalar_lea.vmem %s210, 16
        %v2727 = vld [vmem:[%s2726] sm:$0x3]
        %v2728 = vunpack.c.l.b16 %v2722
        %v2729 = vunpack.c.l.b16 %v2725
        %v2730 = vpack.c.b16 %v2729, %v2728
        %v2732 = vsel %vm707, %v2730, 0
        %v2735 = vsel %vm756, %v2727, 0
        %2737 = vmatprep.subr.bf16.mxu0 0
        %2738 = vmatpush1.bf16.msra.mxu0 %v2735
        %2739 = vmatprep.subr.bf16.mxu0 0
        %2740 = vmatpush1.bf16.msra.mxu0 0
        %2741 = vmatprep.subr.bf16.mxu0 0
        %2742 = vmatpush1.bf16.msra.mxu0 0
        %2743 = vmatprep.subr.bf16.mxu0 0
        %2744 = vmatpush1.bf16.msra.mxu0 0
        %2745 = vmatprep.subr.bf16.mxu0 0
        %2746 = vmatpush1.bf16.msra.mxu0 0
        %2747 = vmatprep.subr.bf16.mxu0 0
        %2748 = vmatpush1.bf16.msra.mxu0 0
        %2749 = vmatprep.subr.bf16.mxu0 0
        %2750 = vmatpush1.bf16.msra.mxu0 0
        %2751 = vmatprep.subr.bf16.mxu0 0
        %2752 = vmatpush1.bf16.msra.mxu0 0
        %2753 = vmatprep.subr.bf16.mxu0 0
        %2754 = vmatpush1.bf16.msra.mxu0 0
        %2755 = vmatprep.subr.bf16.mxu0 0
        %2756 = vmatpush1.bf16.msra.mxu0 0
        %2757 = vmatprep.subr.bf16.mxu0 0
        %2758 = vmatpush1.bf16.msra.mxu0 0
        %2759 = vmatprep.subr.bf16.mxu0 0
        %2760 = vmatpush1.bf16.msra.mxu0 0
        %2761 = vmatprep.subr.bf16.mxu0 0
        %2762 = vmatpush1.bf16.msra.mxu0 0
        %2763 = vmatprep.subr.bf16.mxu0 0
        %2764 = vmatpush1.bf16.msra.mxu0 0
        %2765 = vmatprep.subr.bf16.mxu0 0
        %2766 = vmatpush1.bf16.msra.mxu0 0
        %2767 = vmatprep.subr.bf16.mxu0 0
        %2768 = vmatpush1.bf16.msra.mxu0 0
        %2769 = vmatprep.mubr.bf16.mxu0 0
        %2770 = vmatmul.mubr.bf16.gmra.mrb[0].mxu0 %v1401
        %v2771 = vpop.f32.mrb[0].mxu0
        %v2772 = vadd.f32 0.0, %v2771
        %v2773 = vpop.f32.mrb[0].mxu0
        %v2774 = vpop.f32.mrb[0].mxu0
        %v2775 = vadd.f32 0.0, %v2774
        %v2776 = vpop.f32.mrb[0].mxu0
        %2777 = vmatprep.mubr.bf16.mxu0 0
        %2778 = vmatmul.mubr.bf16.gmra.mrb[0].mxu0 %v1404
        %v2779 = vpop.f32.mrb[0].mxu0
        %v2780 = vadd.f32 0.0, %v2779
        %v2781 = vpop.f32.mrb[0].mxu0
        %v2782 = vpop.f32.mrb[0].mxu0
        %v2783 = vadd.f32 0.0, %v2782
        %v2784 = vpop.f32.mrb[0].mxu0
        %2785 = vmatprep.mubr.bf16.mxu0 0
        %2786 = vmatmul.mubr.bf16.gmra.mrb[0].mxu0 %v1407
        %v2787 = vpop.f32.mrb[0].mxu0
        %v2788 = vadd.f32 0.0, %v2787
        %v2789 = vpop.f32.mrb[0].mxu0
        %v2790 = vpop.f32.mrb[0].mxu0
        %v2791 = vadd.f32 0.0, %v2790
        %v2792 = vpop.f32.mrb[0].mxu0
        %2793 = vmatprep.mubr.bf16.mxu0 0
        %2794 = vmatmul.mubr.bf16.gmra.mrb[0].mxu0 %v1410
        %v2795 = vpop.f32.mrb[0].mxu0
        %v2796 = vadd.f32 0.0, %v2795
        %v2797 = vpop.f32.mrb[0].mxu0
        %v2798 = vpop.f32.mrb[0].mxu0
        %v2799 = vadd.f32 0.0, %v2798
        %v2800 = vpop.f32.mrb[0].mxu0
        %2801 = vmatprep.mubr.bf16.mxu0 0
        %2802 = vmatmul.mubr.bf16.gmra.mrb[0].mxu0 %v1413
        %v2803 = vpop.f32.mrb[0].mxu0
        %v2804 = vadd.f32 0.0, %v2803
        %v2805 = vpop.f32.mrb[0].mxu0
        %v2806 = vpop.f32.mrb[0].mxu0
        %v2807 = vadd.f32 0.0, %v2806
        %v2808 = vpop.f32.mrb[0].mxu0
        %2809 = vmatprep.mubr.bf16.mxu0 0
        %2810 = vmatmul.mubr.bf16.gmra.mrb[0].mxu0 %v1416
        %v2811 = vpop.f32.mrb[0].mxu0
        %v2812 = vadd.f32 0.0, %v2811
        %v2813 = vpop.f32.mrb[0].mxu0
        %v2814 = vpop.f32.mrb[0].mxu0
        %v2815 = vadd.f32 0.0, %v2814
        %v2816 = vpop.f32.mrb[0].mxu0
        %2817 = vmatprep.mubr.bf16.mxu0 0
        %2818 = vmatmul.mubr.bf16.gmra.mrb[0].mxu0 %v1419
        %v2819 = vpop.f32.mrb[0].mxu0
        %v2820 = vadd.f32 0.0, %v2819
        %v2821 = vpop.f32.mrb[0].mxu0
        %v2822 = vpop.f32.mrb[0].mxu0
        %v2823 = vadd.f32 0.0, %v2822
        %v2824 = vpop.f32.mrb[0].mxu0
        %2825 = vmatprep.mubr.bf16.mxu0 0
        %2826 = vmatmul.mubr.bf16.gmra.mrb[0].mxu0 %v1422
        %v2827 = vpop.f32.mrb[0].mxu0
        %v2828 = vadd.f32 0.0, %v2827
        %v2829 = vpop.f32.mrb[0].mxu0
        %v2830 = vpop.f32.mrb[0].mxu0
        %v2831 = vadd.f32 0.0, %v2830
        %v2832 = vpop.f32.mrb[0].mxu0
        %2833 = vmatprep.mubr.bf16.mxu0 0
        %2834 = vmatmul.mubr.bf16.gmra.mrb[0].mxu0 %v1425
        %v2835 = vpop.f32.mrb[0].mxu0
        %v2836 = vadd.f32 0.0, %v2835
        %v2837 = vpop.f32.mrb[0].mxu0
        %v2838 = vpop.f32.mrb[0].mxu0
        %v2839 = vadd.f32 0.0, %v2838
        %v2840 = vpop.f32.mrb[0].mxu0
        %2841 = vmatprep.mubr.bf16.mxu0 0
        %2842 = vmatmul.mubr.bf16.gmra.mrb[0].mxu0 %v1428
        %v2843 = vpop.f32.mrb[0].mxu0
        %v2844 = vadd.f32 0.0, %v2843
        %v2845 = vpop.f32.mrb[0].mxu0
        %v2846 = vpop.f32.mrb[0].mxu0
        %v2847 = vadd.f32 0.0, %v2846
        %v2848 = vpop.f32.mrb[0].mxu0
        %2849 = vmatprep.mubr.bf16.mxu0 0
        %2850 = vmatmul.mubr.bf16.gmra.mrb[0].mxu0 %v1431
        %v2851 = vpop.f32.mrb[0].mxu0
        %v2852 = vadd.f32 0.0, %v2851
        %v2853 = vpop.f32.mrb[0].mxu0
        %v2854 = vpop.f32.mrb[0].mxu0
        %v2855 = vadd.f32 0.0, %v2854
        %v2856 = vpop.f32.mrb[0].mxu0
        %2857 = vmatprep.mubr.bf16.mxu0 0
        %2858 = vmatmul.mubr.bf16.gmra.mrb[0].mxu0 %v1434
        %v2859 = vpop.f32.mrb[0].mxu0
        %v2860 = vadd.f32 0.0, %v2859
        %v2861 = vpop.f32.mrb[0].mxu0
        %v2862 = vpop.f32.mrb[0].mxu0
        %v2863 = vadd.f32 0.0, %v2862
        %v2864 = vpop.f32.mrb[0].mxu0
        %2865 = vmatprep.mubr.bf16.mxu0 0
        %2866 = vmatmul.mubr.bf16.gmra.mrb[0].mxu0 %v1437
        %v2867 = vpop.f32.mrb[0].mxu0
        %v2868 = vadd.f32 0.0, %v2867
        %v2869 = vpop.f32.mrb[0].mxu0
        %v2870 = vpop.f32.mrb[0].mxu0
        %v2871 = vadd.f32 0.0, %v2870
        %v2872 = vpop.f32.mrb[0].mxu0
        %2873 = vmatprep.mubr.bf16.mxu0 0
        %2874 = vmatmul.mubr.bf16.gmra.mrb[0].mxu0 %v1440
        %v2875 = vpop.f32.mrb[0].mxu0
        %v2876 = vadd.f32 0.0, %v2875
        %v2877 = vpop.f32.mrb[0].mxu0
        %v2878 = vpop.f32.mrb[0].mxu0
        %v2879 = vadd.f32 0.0, %v2878
        %v2880 = vpop.f32.mrb[0].mxu0
        %2881 = vmatprep.mubr.bf16.mxu0 0
        %2882 = vmatmul.mubr.bf16.gmra.mrb[0].mxu0 %v2086
        %v2883 = vpop.f32.mrb[0].mxu0
        %v2884 = vadd.f32 0.0, %v2883
        %v2885 = vpop.f32.mrb[0].mxu0
        %v2886 = vpop.f32.mrb[0].mxu0
        %v2887 = vadd.f32 0.0, %v2886
        %v2888 = vpop.f32.mrb[0].mxu0
        %2889 = vmatprep.mubr.bf16.mxu0 0
        %2890 = vmatmul.mubr.bf16.gmra.mrb[0].mxu0 %v2732
        %v2891 = vpop.f32.mrb[0].mxu0
        %v2892 = vadd.f32 0.0, %v2891
        %v2893 = vpop.f32.mrb[0].mxu0
        %v2894 = vpop.f32.mrb[0].mxu0
        %v2895 = vadd.f32 0.0, %v2894
        %v2896 = vpop.f32.mrb[0].mxu0
        %2897 = vdwg.mxu0
        %v2898 = vadd.f32 %v2686, %v2772
        %v2899 = vadd.f32 %v2687, %v2775
        %v2900 = vadd.f32 %v2688, %v2780
        %v2901 = vadd.f32 %v2689, %v2783
        %v2902 = vadd.f32 %v2690, %v2788
        %v2903 = vadd.f32 %v2691, %v2791
        %v2904 = vadd.f32 %v2692, %v2796
        %v2905 = vadd.f32 %v2693, %v2799
        %v2906 = vadd.f32 %v2694, %v2804
        %v2907 = vadd.f32 %v2695, %v2807
        %v2908 = vadd.f32 %v2696, %v2812
        %v2909 = vadd.f32 %v2697, %v2815
        %v2910 = vadd.f32 %v2698, %v2820
        %v2911 = vadd.f32 %v2699, %v2823
        %v2912 = vadd.f32 %v2700, %v2828
        %v2913 = vadd.f32 %v2701, %v2831
        %v2914 = vadd.f32 %v2702, %v2836
        %v2915 = vadd.f32 %v2703, %v2839
        %v2916 = vadd.f32 %v2704, %v2844
        %v2917 = vadd.f32 %v2705, %v2847
        %v2918 = vadd.f32 %v2706, %v2852
        %v2919 = vadd.f32 %v2707, %v2855
        %v2920 = vadd.f32 %v2708, %v2860
        %v2921 = vadd.f32 %v2709, %v2863
        %v2922 = vadd.f32 %v2710, %v2868
        %v2923 = vadd.f32 %v2711, %v2871
        %v2924 = vadd.f32 %v2712, %v2876
        %v2925 = vadd.f32 %v2713, %v2879
        %v2926 = vadd.f32 %v2714, %v2884
        %v2927 = vadd.f32 %v2715, %v2887
        %v2928 = vadd.f32 %v2716, %v2892
        %v2929 = vadd.f32 %v2717, %v2895
        %v2930 = vld [vmem:[%s213] sm:$0x1]
        %v2932 = vlaneseq
        %v2933 = vshrl.u32 %v2932, 7
        %v2934 = vsub.s32 0, %v2933
        %v2935 = vrot.slane %v2930, %v2934
        %v2937 = vadd.f32 %v2898, %v2935
        %v2938 = vadd.f32 %v2899, %v2935
        %v2939 = vadd.f32 %v2900, %v2935
        %v2940 = vadd.f32 %v2901, %v2935
        %v2941 = vadd.f32 %v2902, %v2935
        %v2942 = vadd.f32 %v2903, %v2935
        %v2943 = vadd.f32 %v2904, %v2935
        %v2944 = vadd.f32 %v2905, %v2935
        %v2945 = vadd.f32 %v2906, %v2935
        %v2946 = vadd.f32 %v2907, %v2935
        %v2947 = vadd.f32 %v2908, %v2935
        %v2948 = vadd.f32 %v2909, %v2935
        %v2949 = vadd.f32 %v2910, %v2935
        %v2950 = vadd.f32 %v2911, %v2935
        %v2951 = vadd.f32 %v2912, %v2935
        %v2952 = vadd.f32 %v2913, %v2935
        %v2953 = vadd.f32 %v2914, %v2935
        %v2954 = vadd.f32 %v2915, %v2935
        %v2955 = vadd.f32 %v2916, %v2935
        %v2956 = vadd.f32 %v2917, %v2935
        %v2957 = vadd.f32 %v2918, %v2935
        %v2958 = vadd.f32 %v2919, %v2935
        %v2959 = vadd.f32 %v2920, %v2935
        %v2960 = vadd.f32 %v2921, %v2935
        %v2961 = vadd.f32 %v2922, %v2935
        %v2962 = vadd.f32 %v2923, %v2935
        %v2963 = vadd.f32 %v2924, %v2935
        %v2964 = vadd.f32 %v2925, %v2935
        %v2965 = vadd.f32 %v2926, %v2935
        %v2966 = vadd.f32 %v2927, %v2935
        %v2967 = vadd.f32 %v2928, %v2935
        %v2968 = vadd.f32 %v2929, %v2935
        %v2969 = vmax.f32 %v2937, 0.0
        %v2970 = vmax.f32 %v2938, 0.0
        %v2971 = vmax.f32 %v2939, 0.0
        %v2972 = vmax.f32 %v2940, 0.0
        %v2973 = vmax.f32 %v2941, 0.0
        %v2974 = vmax.f32 %v2942, 0.0
        %v2975 = vmax.f32 %v2943, 0.0
        %v2976 = vmax.f32 %v2944, 0.0
        %v2977 = vmax.f32 %v2945, 0.0
        %v2978 = vmax.f32 %v2946, 0.0
        %v2979 = vmax.f32 %v2947, 0.0
        %v2980 = vmax.f32 %v2948, 0.0
        %v2981 = vmax.f32 %v2949, 0.0
        %v2982 = vmax.f32 %v2950, 0.0
        %v2983 = vmax.f32 %v2951, 0.0
        %v2984 = vmax.f32 %v2952, 0.0
        %v2985 = vmax.f32 %v2953, 0.0
        %v2986 = vmax.f32 %v2954, 0.0
        %v2987 = vmax.f32 %v2955, 0.0
        %v2988 = vmax.f32 %v2956, 0.0
        %v2989 = vmax.f32 %v2957, 0.0
        %v2990 = vmax.f32 %v2958, 0.0
        %v2991 = vmax.f32 %v2959, 0.0
        %v2992 = vmax.f32 %v2960, 0.0
        %v2993 = vmax.f32 %v2961, 0.0
        %v2994 = vmax.f32 %v2962, 0.0
        %v2995 = vmax.f32 %v2963, 0.0
        %v2996 = vmax.f32 %v2964, 0.0
        %v2997 = vmax.f32 %v2965, 0.0
        %v2998 = vmax.f32 %v2966, 0.0
        %v2999 = vmax.f32 %v2967, 0.0
        %v3000 = vmax.f32 %v2968, 0.0
        %v3001 = vpack.c.bf16 %v2970, %v2969
        %v3002 = vpack.c.bf16 %v2972, %v2971
        %v3003 = vpack.c.bf16 %v2974, %v2973
        %v3004 = vpack.c.bf16 %v2976, %v2975
        %v3005 = vpack.c.bf16 %v2978, %v2977
        %v3006 = vpack.c.bf16 %v2980, %v2979
        %v3007 = vpack.c.bf16 %v2982, %v2981
        %v3008 = vpack.c.bf16 %v2984, %v2983
        %v3009 = vpack.c.bf16 %v2986, %v2985
        %v3010 = vpack.c.bf16 %v2988, %v2987
        %v3011 = vpack.c.bf16 %v2990, %v2989
        %v3012 = vpack.c.bf16 %v2992, %v2991
        %v3013 = vpack.c.bf16 %v2994, %v2993
        %v3014 = vpack.c.bf16 %v2996, %v2995
        %v3015 = vpack.c.bf16 %v2998, %v2997
        %v3016 = vpack.c.bf16 %v3000, %v2999
        %v3033 = vunpack.c.l.b16 %v3001
        %v3034 = vunpack.c.h.b16 %v3001
        %v3035 = vunpack.c.l.b16 %v3002
        %v3036 = vunpack.c.h.b16 %v3002
        %v3037 = vunpack.c.l.b16 %v3003
        %v3038 = vunpack.c.h.b16 %v3003
        %v3039 = vunpack.c.l.b16 %v3004
        %v3040 = vunpack.c.h.b16 %v3004
        %v3041 = vunpack.c.l.b16 %v3005
        %v3042 = vunpack.c.h.b16 %v3005
        %v3043 = vunpack.c.l.b16 %v3006
        %v3044 = vunpack.c.h.b16 %v3006
        %v3045 = vunpack.c.l.b16 %v3007
        %v3046 = vunpack.c.h.b16 %v3007
        %v3047 = vunpack.c.l.b16 %v3008
        %v3048 = vunpack.c.h.b16 %v3008
        %v3049 = vunpack.c.l.b16 %v3009
        %v3050 = vunpack.c.h.b16 %v3009
        %v3051 = vunpack.c.l.b16 %v3010
        %v3052 = vunpack.c.h.b16 %v3010
        %v3053 = vunpack.c.l.b16 %v3011
        %v3054 = vunpack.c.h.b16 %v3011
        %v3055 = vunpack.c.l.b16 %v3012
        %v3056 = vunpack.c.h.b16 %v3012
        %v3057 = vunpack.c.l.b16 %v3013
        %v3058 = vunpack.c.h.b16 %v3013
        %v3059 = vunpack.c.l.b16 %v3014
        %v3060 = vunpack.c.h.b16 %v3014
        %v3061 = vunpack.c.l.b16 %v3015
        %v3062 = vunpack.c.h.b16 %v3015
        %v3063 = vunpack.c.l.b16 %v3016
        %v3064 = vunpack.c.h.b16 %v3016
        %v3065 = vpack.c.b16 %v3033, %v3033
        %v3066 = vpack.c.b16 %v3034, %v3034
        %v3067 = vpack.c.b16 %v3035, %v3035
        %v3068 = vpack.c.b16 %v3036, %v3036
        %v3069 = vpack.c.b16 %v3037, %v3037
        %v3070 = vpack.c.b16 %v3038, %v3038
        %v3071 = vpack.c.b16 %v3039, %v3039
        %v3072 = vpack.c.b16 %v3040, %v3040
        %v3073 = vpack.c.b16 %v3041, %v3041
        %v3074 = vpack.c.b16 %v3042, %v3042
        %v3075 = vpack.c.b16 %v3043, %v3043
        %v3076 = vpack.c.b16 %v3044, %v3044
        %v3077 = vpack.c.b16 %v3045, %v3045
        %v3078 = vpack.c.b16 %v3046, %v3046
        %v3079 = vpack.c.b16 %v3047, %v3047
        %v3080 = vpack.c.b16 %v3048, %v3048
        %v3081 = vpack.c.b16 %v3049, %v3049
        %v3082 = vpack.c.b16 %v3050, %v3050
        %v3083 = vpack.c.b16 %v3051, %v3051
        %v3084 = vpack.c.b16 %v3052, %v3052
        %v3085 = vpack.c.b16 %v3053, %v3053
        %v3086 = vpack.c.b16 %v3054, %v3054
        %v3087 = vpack.c.b16 %v3055, %v3055
        %v3088 = vpack.c.b16 %v3056, %v3056
        %v3089 = vpack.c.b16 %v3057, %v3057
        %v3090 = vpack.c.b16 %v3058, %v3058
        %v3091 = vpack.c.b16 %v3059, %v3059
        %v3092 = vpack.c.b16 %v3060, %v3060
        %v3093 = vpack.c.b16 %v3061, %v3061
        %v3094 = vpack.c.b16 %v3062, %v3062
        %v3095 = vpack.c.b16 %v3063, %v3063
        %v3096 = vpack.c.b16 %v3064, %v3064
        %3129 = vst [vmem:[%s201] sm:$0xf] %v3065
        %3130 = vst [vmem:[%s201 + $0x4] sm:$0xf] %v3066
        %3131 = vst [vmem:[%s201 + $0x8] sm:$0xf] %v3067
        %3132 = vst [vmem:[%s201 + $0xc] sm:$0xf] %v3068
        %3133 = vst [vmem:[%s201 + $0x10] sm:$0xf] %v3069
        %3134 = vst [vmem:[%s201 + $0x14] sm:$0xf] %v3070
        %3135 = vst [vmem:[%s201 + $0x18] sm:$0xf] %v3071
        %3136 = vst [vmem:[%s201 + $0x1c] sm:$0xf] %v3072
        %3137 = vst [vmem:[%s201 + $0x20] sm:$0xf] %v3073
        %3138 = vst [vmem:[%s201 + $0x24] sm:$0xf] %v3074
        %3139 = vst [vmem:[%s201 + $0x28] sm:$0xf] %v3075
        %3140 = vst [vmem:[%s201 + $0x2c] sm:$0xf] %v3076
        %3141 = vst [vmem:[%s201 + $0x30] sm:$0xf] %v3077
        %3142 = vst [vmem:[%s201 + $0x34] sm:$0xf] %v3078
        %3143 = vst [vmem:[%s201 + $0x38] sm:$0xf] %v3079
        %3144 = vst [vmem:[%s201 + $0x3c] sm:$0xf] %v3080
        %3145 = vst [vmem:[%s201 + $0x40] sm:$0xf] %v3081
        %3146 = vst [vmem:[%s201 + $0x44] sm:$0xf] %v3082
        %3147 = vst [vmem:[%s201 + $0x48] sm:$0xf] %v3083
        %3148 = vst [vmem:[%s201 + $0x4c] sm:$0xf] %v3084
        %3149 = vst [vmem:[%s201 + $0x50] sm:$0xf] %v3085
        %3150 = vst [vmem:[%s201 + $0x54] sm:$0xf] %v3086
        %3151 = vst [vmem:[%s201 + $0x58] sm:$0xf] %v3087
        %3152 = vst [vmem:[%s201 + $0x5c] sm:$0xf] %v3088
        %3153 = vst [vmem:[%s201 + $0x60] sm:$0xf] %v3089
        %3154 = vst [vmem:[%s201 + $0x64] sm:$0xf] %v3090
        %3155 = vst [vmem:[%s201 + $0x68] sm:$0xf] %v3091
        %3156 = vst [vmem:[%s201 + $0x6c] sm:$0xf] %v3092
        %3157 = vst [vmem:[%s201 + $0x70] sm:$0xf] %v3093
        %3158 = vst [vmem:[%s201 + $0x74] sm:$0xf] %v3094
        %3159 = vst [vmem:[%s201 + $0x78] sm:$0xf] %v3095
        %3160 = vst [vmem:[%s201 + $0x7c] sm:$0xf] %v3096
        %s3161 = sand.u32 %s117, 1
        %s3162 = scalar_lea.sflag [#allocation3], %s3161
        %s3163 = sand.u32 %s117, 1
        %s3164 = smul.addr %s3163, 128
        %s3165 = scalar_lea.vmem [#allocation2], %s3164
        // Predicated region
        $region33: #{tpu_custom_call.1} parent=31 // pred_check
          %p3166 = pneg %p127
        $region34: #{tpu_custom_call.1} parent=31 // pred_check_branch
          %3168 = sbr.rel (%p3166) target = $region36
        $region35: #{tpu_custom_call.1} parent=31 // pred_region
          %s3170 = ssub.s32 2048, 2048
          %3171 = vsyncadd %s3162, %s3170
          %s3172 = smul.addr %s21, 32
          %s3173 = sadd.s32 %s22, %s3172
          %s3174 = smul.addr %s3173, 64
          %s3175 = scalar_lea.hbm %s3, %s3174
          %s3176 = sshll.u32 %s3165, 4
          %s3177 = int_to_ptr.vmem [resolvable:$true] %s3176
          %3182 = dma.vmem_to_hbm [thread:$0]  %s3177, 2048, %s3175, %s3162, 64, 64, 4
        $region36: #{tpu_custom_call.1} parent=31 // pred_fallthru
          _
      $region32: #{tpu_custom_call.1} parent=5 // pred_fallthru
        _
      %p3183 = scmp.le.s32.totalorder 2, %s12
      // Predicated region
      $region37: #{tpu_custom_call.1} parent=5 // pred_check
        %p3184 = pneg %p3183
      $region38: #{tpu_custom_call.1} parent=5 // pred_check_branch
        %3186 = sbr.rel (%p3184) target = $region40
      $region39: #{tpu_custom_call.1} parent=5 // pred_region
        %s3187 = ssub.s32 %s12, 2
        // Predicated region
        $region41: #{tpu_custom_call.1} parent=39 // pred_check
          %p3188 = pneg %p133
        $region42: #{tpu_custom_call.1} parent=39 // pred_check_branch
          %3190 = sbr.rel (%p3188) target = $region44
        $region43: #{tpu_custom_call.1} parent=39 // pred_region
          %s3191 = sand.u32 %s118, 1
          %s3192 = scalar_lea.sflag [#allocation3], %s3191
          %s3193 = sand.u32 %s118, 1
          %s3194 = smul.addr %s3193, 128
          %s3195 = scalar_lea.vmem [#allocation2], %s3194
          %3196 = dma.done %s3192, 2048
        $region44: #{tpu_custom_call.1} parent=39 // pred_fallthru
          _
      $region40: #{tpu_custom_call.1} parent=5 // pred_fallthru
        _
    $region6: #{tpu_custom_call.1} parent=1 // loop_footer
      %s16 = sadd.s32 1, %s12
    $region7: #{tpu_custom_call.1} parent=1 // loop_footer_branch
      %11 = sbr.rel target = $region3
    $region8: #{tpu_custom_call.1} parent=1 // loop_exit
      _
    %3197 = vsyncpa [#allocation3], 1
    %s3198 = scalar_lea.sflag [#allocation3], 1
    %3199 = vsyncpa %s3198, 1

</llo_original>
